<compile_context>
chip_gen: v5e
topology: v5e:2x2
jax: 0.10.0
libtpu: 0.0.40
codegen_flags: <defaults>
</compile_context>

<pallas_src>
import functools
import numpy as np
import jax
import jax.numpy as jnp
from jax import lax
from jax.experimental import pallas as pl
from jax.experimental.pallas import tpu as pltpu


# ----------------------------- Pallas kernel -------------------------------

def _lstm2_kernel(lens_ref, xw0_ref, whh0_ref, w1_ref, b1_ref,
                  out_ref,
                  h01, c0, c1):
    """One grid step = one chunk of Tc timesteps.

    Carries the recurrent state in VMEM scratch:
      h01: (Bp, 2H) packed [h_layer0 | h_layer1]  (so the layer-1 fused matmul
           reads it directly, no per-step concatenate)
      c0, c1: (Bp, H) cell states.
    """
    blk = pl.program_id(0)
    Tc = xw0_ref.shape[0]
    Bp = h01.shape[0]
    H = c0.shape[-1]

    @pl.when(blk == 0)
    def _():
        h01[...] = jnp.zeros_like(h01)
        c0[...] = jnp.zeros_like(c0)
        c1[...] = jnp.zeros_like(c1)

    t0 = blk * Tc
    lens = lens_ref[...]                                   # (Bp, 1) int32
    whh0 = whh0_ref[...]                                   # (H, 4H)
    w1 = w1_ref[...]                                       # (2H, 4H) = [W_ih1; W_hh1]
    b1 = jnp.broadcast_to(b1_ref[...], (Bp, 4 * H))        # hoisted broadcast

    def gates_to_hc(gates, c):
        # PyTorch gate ordering: i, f, g, o
        i = jax.nn.sigmoid(gates[:, 0 * H:1 * H])
        f = jax.nn.sigmoid(gates[:, 1 * H:2 * H])
        g = jnp.tanh(gates[:, 2 * H:3 * H])
        o = jax.nn.sigmoid(gates[:, 3 * H:4 * H])
        c_new = f * c + i * g
        h_new = o * jnp.tanh(c_new)
        return h_new, c_new

    # Static unroll over the (small) time chunk; Tc is a Python int.
    for i in range(Tc):
        valid = jnp.broadcast_to(lens > (t0 + i), (Bp, H))  # one broadcast, reused

        # Layer 0: input projection (x @ W_ih0 + b0) was precomputed outside;
        # only the recurrent matmul remains.
        gates0 = xw0_ref[i] + jnp.dot(h01[:, :H], whh0,
                                      preferred_element_type=jnp.float32)
        h0n, c0n = gates_to_hc(gates0, c0[...])
        h01[:, :H] = jnp.where(valid, h0n, h01[:, :H])
        c0[...] = jnp.where(valid, c0n, c0[...])

        # Layer 1: single fused MXU call over packed [h0 | h1].
        gates1 = jnp.dot(h01[...], w1,
                         preferred_element_type=jnp.float32) + b1
        h1n, c1n = gates_to_hc(gates1, c1[...])
        h1m = jnp.where(valid, h1n, h01[:, H:])
        h01[:, H:] = h1m
        c1[...] = jnp.where(valid, c1n, c1[...])

        # pad_packed_sequence pads with zeros beyond each sequence's length.
        out_ref[i] = jnp.where(valid, h1m, jnp.zeros_like(h1m))


# ------------------------------- Wrapper ------------------------------------

def _round_up(x, m):
    return (x + m - 1) // m * m


@functools.partial(jax.jit, static_argnames=("hidden", "time_chunk"))
def _lstm2_pallas(xw0, lens_b1, whh0, w1, b1, *, hidden, time_chunk):
    Tp, Bp, _ = xw0.shape
    H = hidden
    Tc = time_chunk
    nblk = Tp // Tc

    grid_spec = pltpu.PrefetchScalarGridSpec(
        num_scalar_prefetch=0,
        grid=(nblk,),
        in_specs=[
            pl.BlockSpec((Bp, 1), lambda b: (0, 0)),             # lengths
            pl.BlockSpec((Tc, Bp, 4 * H), lambda b: (b, 0, 0)),  # precomputed xW0+b0
            pl.BlockSpec((H, 4 * H), lambda b: (0, 0)),          # W_hh layer0
            pl.BlockSpec((2 * H, 4 * H), lambda b: (0, 0)),      # [W_ih1; W_hh1]
            pl.BlockSpec((1, 4 * H), lambda b: (0, 0)),          # bias layer1
        ],
        out_specs=pl.BlockSpec((Tc, Bp, H), lambda b: (b, 0, 0)),
        scratch_shapes=[
            pltpu.VMEM((Bp, 2 * H), jnp.float32),   # packed [h0 | h1]
            pltpu.VMEM((Bp, H), jnp.float32),       # c0
            pltpu.VMEM((Bp, H), jnp.float32),       # c1
        ],
    )
    # Note: for very large H on v7x (64 MiB VMEM), the time-invariant weight
    # specs should be single-buffered (pl.Buffered(1)) and vmem_limit_bytes
    # raised; unnecessary at these sizes so we keep the defaults.
    return pl.pallas_call(
        _lstm2_kernel,
        out_shape=jax.ShapeDtypeStruct((Tp, Bp, H), jnp.float32),
        grid_spec=grid_spec,
        compiler_params=pltpu.CompilerParams(
            dimension_semantics=("arbitrary",)),  # sequential carry over time
    )(lens_b1, xw0, whh0, w1, b1)


def lstm_forward(x_bte, sentence_lens, params, hidden, time_chunk=8):
    """Mirrors LSTM.forward: x (B, T, E) batch_first, returns (B, max(lens), H)."""
    B, T, E = x_bte.shape
    H = hidden
    max_len = int(max(sentence_lens))          # static: pad_packed returns this length
    Tc = min(time_chunk, _round_up(max_len, 1))
    Bp = _round_up(B, 8)
    Tp = _round_up(max_len, Tc)

    # Truncate to max_len (no work past the longest sequence), go time-major,
    # pad batch and chunked time with zeros.
    x_tbe = jnp.transpose(x_bte[:, :max_len].astype(jnp.float32), (1, 0, 2))
    x_tbe = jnp.pad(x_tbe, ((0, Tp - max_len), (0, Bp - B), (0, 0)))

    # Hoisted layer-0 input projection: one large matmul over all timesteps.
    xw0 = jnp.einsum("tbe,eg->tbg", x_tbe, params["wih0"]) + params["b0"]

    lens = jnp.zeros((Bp, 1), jnp.int32).at[:B, 0].set(
        jnp.asarray(sentence_lens, jnp.int32))

    # Fuse layer-1 input/recurrent weights along K.
    w1 = jnp.concatenate([params["wih1"], params["whh1"]], axis=0)  # (2H, 4H)

    out = _lstm2_pallas(xw0, lens, params["whh0"], w1, params["b1"],
                        hidden=H, time_chunk=Tc)
    return jnp.transpose(out[:max_len, :B, :], (1, 0, 2))


# --------------------------- pure-JAX reference -----------------------------

def lstm_reference(x_bte, sentence_lens, params, hidden):
    B, T, E = x_bte.shape
    H = hidden
    lens = jnp.asarray(sentence_lens, jnp.int32)

    def cell(x_in, h, c, wih, whh, b):
        gates = x_in @ wih + h @ whh + b
        i = jax.nn.sigmoid(gates[:, :H])
        f = jax.nn.sigmoid(gates[:, H:2 * H])
        g = jnp.tanh(gates[:, 2 * H:3 * H])
        o = jax.nn.sigmoid(gates[:, 3 * H:])
        c_new = f * c + i * g
        return o * jnp.tanh(c_new), c_new

    def step(carry, inp):
        h0, c0, h1, c1 = carry
        t, x_t = inp
        valid = (lens > t)[:, None]
        h0n, c0n = cell(x_t, h0, c0, params["wih0"], params["whh0"], params["b0"])
        h0 = jnp.where(valid, h0n, h0)
        c0 = jnp.where(valid, c0n, c0)
        h1n, c1n = cell(h0, h1, c1, params["wih1"], params["whh1"], params["b1"])
        h1 = jnp.where(valid, h1n, h1)
        c1 = jnp.where(valid, c1n, c1)
        return (h0, c0, h1, c1), jnp.where(valid, h1, 0.0)

    z = jnp.zeros((B, H), jnp.float32)
    xs = jnp.transpose(x_bte, (1, 0, 2)).astype(jnp.float32)
    _, outs = lax.scan(step, (z, z, z, z), (jnp.arange(T), xs))
    max_len = int(max(sentence_lens))
    return jnp.transpose(outs, (1, 0, 2))[:, :max_len, :]


# --------------------------------- main --------------------------------------

if __name__ == "__main__":
    # Module defaults: embedding_dim=3, batch_size=5; hidden kept small (=128,
    # lane-aligned) instead of 256 for a quick test.
    B, T, E, H = 5, 8, 3, 128
    key = jax.random.PRNGKey(0)
    k_x, k1, k2, k3, k4, k5, k6 = jax.random.split(key, 7)

    # Deterministic synthetic parameters, PyTorch-style uniform(-1/sqrt(H), 1/sqrt(H)).
    # (bias here = b_ih + b_hh combined; stored transposed as (in_dim, 4H))
    k_ = 1.0 / np.sqrt(H)
    params = {
        "wih0": jax.random.uniform(k1, (E, 4 * H), jnp.float32, -k_, k_),
        "whh0": jax.random.uniform(k2, (H, 4 * H), jnp.float32, -k_, k_),
        "b0":   jax.random.uniform(k3, (1, 4 * H), jnp.float32, -k_, k_),
        "wih1": jax.random.uniform(k4, (H, 4 * H), jnp.float32, -k_, k_),
        "whh1": jax.random.uniform(k5, (H, 4 * H), jnp.float32, -k_, k_),
        "b1":   jax.random.uniform(k6, (1, 4 * H), jnp.float32, -k_, k_),
    }

    # Padded batch of sequences (batch_first), lengths sorted descending as
    # required by pack_padded_sequence(enforce_sorted=True).
    sentence_lens = [8, 7, 5, 3, 1]
    x = jax.random.normal(k_x, (B, T, E), jnp.float32)
    # zero the padded timesteps (as a padded batch would have)
    tmask = (jnp.arange(T)[None, :, None] < jnp.asarray(sentence_lens)[:, None, None])
    x = x * tmask

    # time_chunk=4 -> two grid steps, exercising the cross-chunk state carry.
    pred = lstm_forward(x, sentence_lens, params, hidden=H, time_chunk=4)
    pred = jax.block_until_ready(pred)

    ref = lstm_reference(x, sentence_lens, params, hidden=H)
    np.testing.assert_allclose(np.asarray(pred), np.asarray(ref),
                               rtol=1e-4, atol=1e-4)

    # TODO(synk): LSTM.loss uses a numpy-equality mask + MSELoss (and returns the
    # loss module itself); it is not part of forward() and is not implemented here.
    print("KERNEL_OK")
</pallas_src>

<mosaic_0001>
module attributes {stable_mosaic.version = 11 : i64} {
  func.func @_lstm2_kernel(%arg0: i32, %arg1: memref<8x1xi32, #tpu.memory_space<vmem>>, %arg2: memref<4x8x512xf32, #tpu.memory_space<vmem>>, %arg3: memref<128x512xf32, #tpu.memory_space<vmem>>, %arg4: memref<256x512xf32, #tpu.memory_space<vmem>>, %arg5: memref<1x512xf32, #tpu.memory_space<vmem>>, %arg6: memref<4x8x128xf32, #tpu.memory_space<vmem>>, %arg7: memref<8x256xf32, #tpu.memory_space<vmem>>, %arg8: memref<8x128xf32, #tpu.memory_space<vmem>>, %arg9: memref<8x128xf32, #tpu.memory_space<vmem>>) attributes {dimension_semantics = [#tpu.dimension_semantics<arbitrary>], iteration_bounds = array<i64: 2>, scalar_prefetch = 0 : i64, scratch_operands = 3 : i64, tpu.core_type = #tpu.core_type<tc>, window_params = [{pipeline_mode = #tpu.pipeline_mode<synchronous>, transform_indices = @transform_0, window_bounds = array<i64: 8, 1>}, {transform_indices = @transform_1, window_bounds = array<i64: 4, 8, 512>}, {pipeline_mode = #tpu.pipeline_mode<synchronous>, transform_indices = @transform_2, window_bounds = array<i64: 128, 512>}, {pipeline_mode = #tpu.pipeline_mode<synchronous>, transform_indices = @transform_3, window_bounds = array<i64: 256, 512>}, {pipeline_mode = #tpu.pipeline_mode<synchronous>, transform_indices = @transform_4, window_bounds = array<i64: 1, 512>}, {transform_indices = @transform_5, window_bounds = array<i64: 4, 8, 128>}]} {
    %c0_i32 = arith.constant 0 : i32
    %0 = arith.cmpi eq, %arg0, %c0_i32 : i32
    %1 = arith.extui %0 : i1 to i32
    %c0_i32_0 = arith.constant 0 : i32
    %2 = arith.cmpi ne, %1, %c0_i32_0 : i32
    scf.if %2 {
      %cst_160 = arith.constant 0.000000e+00 : f32
      %338 = vector.broadcast %cst_160 : f32 to vector<8x256xf32>
      %c0_161 = arith.constant 0 : index
      %c0_162 = arith.constant 0 : index
      %339 = vector.load %arg7[%c0_161, %c0_162] : memref<8x256xf32, #tpu.memory_space<vmem>>, vector<8x256xf32>
      tpu.vector_store %arg7[%c0_161, %c0_162], %338 {strides = array<i32>} : memref<8x256xf32, #tpu.memory_space<vmem>>, vector<8x256xf32>,
      %cst_163 = arith.constant 0.000000e+00 : f32
      %340 = vector.broadcast %cst_163 : f32 to vector<8x128xf32>
      %c0_164 = arith.constant 0 : index
      %c0_165 = arith.constant 0 : index
      %341 = vector.load %arg8[%c0_164, %c0_165] : memref<8x128xf32, #tpu.memory_space<vmem>>, vector<8x128xf32>
      tpu.vector_store %arg8[%c0_164, %c0_165], %340 {strides = array<i32>} : memref<8x128xf32, #tpu.memory_space<vmem>>, vector<8x128xf32>,
      %cst_166 = arith.constant 0.000000e+00 : f32
      %342 = vector.broadcast %cst_166 : f32 to vector<8x128xf32>
      %c0_167 = arith.constant 0 : index
      %c0_168 = arith.constant 0 : index
      %343 = vector.load %arg9[%c0_167, %c0_168] : memref<8x128xf32, #tpu.memory_space<vmem>>, vector<8x128xf32>
      tpu.vector_store %arg9[%c0_167, %c0_168], %342 {strides = array<i32>} : memref<8x128xf32, #tpu.memory_space<vmem>>, vector<8x128xf32>,
    } else {
    }
    %c4_i32 = arith.constant 4 : i32
    %3 = arith.muli %arg0, %c4_i32 : i32
    %c0 = arith.constant 0 : index
    %c0_1 = arith.constant 0 : index
    %4 = vector.load %arg1[%c0, %c0_1] : memref<8x1xi32, #tpu.memory_space<vmem>>, vector<8x1xi32>
    %c0_2 = arith.constant 0 : index
    %c0_3 = arith.constant 0 : index
    %5 = vector.load %arg3[%c0_2, %c0_3] : memref<128x512xf32, #tpu.memory_space<vmem>>, vector<128x512xf32>
    %c0_4 = arith.constant 0 : index
    %c0_5 = arith.constant 0 : index
    %6 = vector.load %arg4[%c0_4, %c0_5] : memref<256x512xf32, #tpu.memory_space<vmem>>, vector<256x512xf32>
    %c0_6 = arith.constant 0 : index
    %c0_7 = arith.constant 0 : index
    %7 = vector.load %arg5[%c0_6, %c0_7] : memref<1x512xf32, #tpu.memory_space<vmem>>, vector<1x512xf32>
    %8 = vector.shape_cast %7 : vector<1x512xf32> to vector<1x512xf32>
    %9 = vector.broadcast %8 : vector<1x512xf32> to vector<8x512xf32>
    %c0_i32_8 = arith.constant 0 : i32
    %10 = arith.addi %3, %c0_i32_8 : i32
    %11 = vector.broadcast %10 : i32 to vector<8x1xi32>
    %12 = arith.cmpi sgt, %4, %11 : vector<8x1xi32>
    %13 = vector.shape_cast %12 : vector<8x1xi1> to vector<8x1xi1>
    %14 = vector.broadcast %13 : vector<8x1xi1> to vector<8x128xi1>
    %c0_9 = arith.constant 0 : index
    %c0_10 = arith.constant 0 : index
    %c0_11 = arith.constant 0 : index
    %15 = vector.load %arg2[%c0_9, %c0_10, %c0_11] : memref<4x8x512xf32, #tpu.memory_space<vmem>>, vector<1x8x512xf32>
    %16 = vector.shape_cast %15 : vector<1x8x512xf32> to vector<8x512xf32>
    %c0_12 = arith.constant 0 : index
    %c0_13 = arith.constant 0 : index
    %17 = vector.load %arg7[%c0_12, %c0_13] : memref<8x256xf32, #tpu.memory_space<vmem>>, vector<8x128xf32>
    %cst = arith.constant dense<0.000000e+00> : vector<8x512xf32>
    %18 = tpu.matmul %17, %5, %cst {dimension_numbers = #tpu.dot_dimension_numbers<[1], [0], [0], [1], [0, 0, 1, 1], [], []>} : vector<8x128xf32>, vector<128x512xf32>, vector<8x512xf32> -> vector<8x512xf32>
    %19 = arith.addf %16, %18 : vector<8x512xf32>
    %c0_14 = arith.constant 0 : index
    %c0_15 = arith.constant 0 : index
    %20 = vector.load %arg8[%c0_14, %c0_15] : memref<8x128xf32, #tpu.memory_space<vmem>>, vector<8x128xf32>
    %21 = vector.extract_strided_slice %19 {offsets = [0, 0], sizes = [8, 128], strides = [1, 1]} : vector<8x512xf32> to vector<8x128xf32>
    %22 = arith.negf %21 : vector<8x128xf32>
    %23 = math.exp %22 : vector<8x128xf32>
    %cst_16 = arith.constant 1.000000e+00 : f32
    %24 = vector.broadcast %cst_16 : f32 to vector<8x128xf32>
    %25 = arith.addf %24, %23 : vector<8x128xf32>
    %26 = arith.divf %24, %25 : vector<8x128xf32>
    %27 = vector.extract_strided_slice %19 {offsets = [0, 128], sizes = [8, 128], strides = [1, 1]} : vector<8x512xf32> to vector<8x128xf32>
    %28 = arith.negf %27 : vector<8x128xf32>
    %29 = math.exp %28 : vector<8x128xf32>
    %cst_17 = arith.constant 1.000000e+00 : f32
    %30 = vector.broadcast %cst_17 : f32 to vector<8x128xf32>
    %31 = arith.addf %30, %29 : vector<8x128xf32>
    %32 = arith.divf %30, %31 : vector<8x128xf32>
    %33 = vector.extract_strided_slice %19 {offsets = [0, 256], sizes = [8, 128], strides = [1, 1]} : vector<8x512xf32> to vector<8x128xf32>
    %34 = math.tanh %33 : vector<8x128xf32>
    %35 = vector.extract_strided_slice %19 {offsets = [0, 384], sizes = [8, 128], strides = [1, 1]} : vector<8x512xf32> to vector<8x128xf32>
    %36 = arith.negf %35 : vector<8x128xf32>
    %37 = math.exp %36 : vector<8x128xf32>
    %cst_18 = arith.constant 1.000000e+00 : f32
    %38 = vector.broadcast %cst_18 : f32 to vector<8x128xf32>
    %39 = arith.addf %38, %37 : vector<8x128xf32>
    %40 = arith.divf %38, %39 : vector<8x128xf32>
    %41 = arith.mulf %32, %20 : vector<8x128xf32>
    %42 = arith.mulf %26, %34 : vector<8x128xf32>
    %43 = arith.addf %41, %42 : vector<8x128xf32>
    %44 = math.tanh %43 : vector<8x128xf32>
    %45 = arith.mulf %40, %44 : vector<8x128xf32>
    %c0_19 = arith.constant 0 : index
    %c0_20 = arith.constant 0 : index
    %46 = vector.load %arg7[%c0_19, %c0_20] : memref<8x256xf32, #tpu.memory_space<vmem>>, vector<8x128xf32>
    %47 = arith.select %14, %45, %46 : vector<8x128xi1>, vector<8x128xf32>
    %c0_21 = arith.constant 0 : index
    %c0_22 = arith.constant 0 : index
    %48 = vector.load %arg7[%c0_21, %c0_22] : memref<8x256xf32, #tpu.memory_space<vmem>>, vector<8x128xf32>
    tpu.vector_store %arg7[%c0_21, %c0_22], %47 {strides = array<i32>} : memref<8x256xf32, #tpu.memory_space<vmem>>, vector<8x128xf32>,
    %c0_23 = arith.constant 0 : index
    %c0_24 = arith.constant 0 : index
    %49 = vector.load %arg8[%c0_23, %c0_24] : memref<8x128xf32, #tpu.memory_space<vmem>>, vector<8x128xf32>
    %50 = arith.select %14, %43, %49 : vector<8x128xi1>, vector<8x128xf32>
    %c0_25 = arith.constant 0 : index
    %c0_26 = arith.constant 0 : index
    %51 = vector.load %arg8[%c0_25, %c0_26] : memref<8x128xf32, #tpu.memory_space<vmem>>, vector<8x128xf32>
    tpu.vector_store %arg8[%c0_25, %c0_26], %50 {strides = array<i32>} : memref<8x128xf32, #tpu.memory_space<vmem>>, vector<8x128xf32>,
    %c0_27 = arith.constant 0 : index
    %c0_28 = arith.constant 0 : index
    %52 = vector.load %arg7[%c0_27, %c0_28] : memref<8x256xf32, #tpu.memory_space<vmem>>, vector<8x256xf32>
    %cst_29 = arith.constant dense<0.000000e+00> : vector<8x512xf32>
    %53 = tpu.matmul %52, %6, %cst_29 {dimension_numbers = #tpu.dot_dimension_numbers<[1], [0], [0], [1], [0, 0, 1, 1], [], []>} : vector<8x256xf32>, vector<256x512xf32>, vector<8x512xf32> -> vector<8x512xf32>
    %54 = arith.addf %53, %9 : vector<8x512xf32>
    %c0_30 = arith.constant 0 : index
    %c0_31 = arith.constant 0 : index
    %55 = vector.load %arg9[%c0_30, %c0_31] : memref<8x128xf32, #tpu.memory_space<vmem>>, vector<8x128xf32>
    %56 = vector.extract_strided_slice %54 {offsets = [0, 0], sizes = [8, 128], strides = [1, 1]} : vector<8x512xf32> to vector<8x128xf32>
    %57 = arith.negf %56 : vector<8x128xf32>
    %58 = math.exp %57 : vector<8x128xf32>
    %cst_32 = arith.constant 1.000000e+00 : f32
    %59 = vector.broadcast %cst_32 : f32 to vector<8x128xf32>
    %60 = arith.addf %59, %58 : vector<8x128xf32>
    %61 = arith.divf %59, %60 : vector<8x128xf32>
    %62 = vector.extract_strided_slice %54 {offsets = [0, 128], sizes = [8, 128], strides = [1, 1]} : vector<8x512xf32> to vector<8x128xf32>
    %63 = arith.negf %62 : vector<8x128xf32>
    %64 = math.exp %63 : vector<8x128xf32>
    %cst_33 = arith.constant 1.000000e+00 : f32
    %65 = vector.broadcast %cst_33 : f32 to vector<8x128xf32>
    %66 = arith.addf %65, %64 : vector<8x128xf32>
    %67 = arith.divf %65, %66 : vector<8x128xf32>
    %68 = vector.extract_strided_slice %54 {offsets = [0, 256], sizes = [8, 128], strides = [1, 1]} : vector<8x512xf32> to vector<8x128xf32>
    %69 = math.tanh %68 : vector<8x128xf32>
    %70 = vector.extract_strided_slice %54 {offsets = [0, 384], sizes = [8, 128], strides = [1, 1]} : vector<8x512xf32> to vector<8x128xf32>
    %71 = arith.negf %70 : vector<8x128xf32>
    %72 = math.exp %71 : vector<8x128xf32>
    %cst_34 = arith.constant 1.000000e+00 : f32
    %73 = vector.broadcast %cst_34 : f32 to vector<8x128xf32>
    %74 = arith.addf %73, %72 : vector<8x128xf32>
    %75 = arith.divf %73, %74 : vector<8x128xf32>
    %76 = arith.mulf %67, %55 : vector<8x128xf32>
    %77 = arith.mulf %61, %69 : vector<8x128xf32>
    %78 = arith.addf %76, %77 : vector<8x128xf32>
    %79 = math.tanh %78 : vector<8x128xf32>
    %80 = arith.mulf %75, %79 : vector<8x128xf32>
    %c0_35 = arith.constant 0 : index
    %c128 = arith.constant 128 : index
    %81 = vector.load %arg7[%c0_35, %c128] : memref<8x256xf32, #tpu.memory_space<vmem>>, vector<8x128xf32>
    %82 = arith.select %14, %80, %81 : vector<8x128xi1>, vector<8x128xf32>
    %c0_36 = arith.constant 0 : index
    %c128_37 = arith.constant 128 : index
    %83 = vector.load %arg7[%c0_36, %c128_37] : memref<8x256xf32, #tpu.memory_space<vmem>>, vector<8x128xf32>
    tpu.vector_store %arg7[%c0_36, %c128_37], %82 {strides = array<i32>} : memref<8x256xf32, #tpu.memory_space<vmem>>, vector<8x128xf32>,
    %c0_38 = arith.constant 0 : index
    %c0_39 = arith.constant 0 : index
    %84 = vector.load %arg9[%c0_38, %c0_39] : memref<8x128xf32, #tpu.memory_space<vmem>>, vector<8x128xf32>
    %85 = arith.select %14, %78, %84 : vector<8x128xi1>, vector<8x128xf32>
    %c0_40 = arith.constant 0 : index
    %c0_41 = arith.constant 0 : index
    %86 = vector.load %arg9[%c0_40, %c0_41] : memref<8x128xf32, #tpu.memory_space<vmem>>, vector<8x128xf32>
    tpu.vector_store %arg9[%c0_40, %c0_41], %85 {strides = array<i32>} : memref<8x128xf32, #tpu.memory_space<vmem>>, vector<8x128xf32>,
    %cst_42 = arith.constant 0.000000e+00 : f32
    %87 = vector.broadcast %cst_42 : f32 to vector<8x128xf32>
    %88 = arith.select %14, %82, %87 : vector<8x128xi1>, vector<8x128xf32>
    %c0_43 = arith.constant 0 : index
    %c0_44 = arith.constant 0 : index
    %c0_45 = arith.constant 0 : index
    %89 = vector.load %arg6[%c0_43, %c0_44, %c0_45] : memref<4x8x128xf32, #tpu.memory_space<vmem>>, vector<1x8x128xf32>
    %90 = vector.shape_cast %89 : vector<1x8x128xf32> to vector<8x128xf32>
    %91 = vector.shape_cast %88 : vector<8x128xf32> to vector<1x8x128xf32>
    tpu.vector_store %arg6[%c0_43, %c0_44, %c0_45], %91 {strides = array<i32>} : memref<4x8x128xf32, #tpu.memory_space<vmem>>, vector<1x8x128xf32>,
    %c1_i32 = arith.constant 1 : i32
    %92 = arith.addi %3, %c1_i32 : i32
    %93 = vector.broadcast %92 : i32 to vector<8x1xi32>
    %94 = arith.cmpi sgt, %4, %93 : vector<8x1xi32>
    %95 = vector.shape_cast %94 : vector<8x1xi1> to vector<8x1xi1>
    %96 = vector.broadcast %95 : vector<8x1xi1> to vector<8x128xi1>
    %c1 = arith.constant 1 : index
    %c0_46 = arith.constant 0 : index
    %c0_47 = arith.constant 0 : index
    %97 = vector.load %arg2[%c1, %c0_46, %c0_47] : memref<4x8x512xf32, #tpu.memory_space<vmem>>, vector<1x8x512xf32>
    %98 = vector.shape_cast %97 : vector<1x8x512xf32> to vector<8x512xf32>
    %c0_48 = arith.constant 0 : index
    %c0_49 = arith.constant 0 : index
    %99 = vector.load %arg7[%c0_48, %c0_49] : memref<8x256xf32, #tpu.memory_space<vmem>>, vector<8x128xf32>
    %cst_50 = arith.constant dense<0.000000e+00> : vector<8x512xf32>
    %100 = tpu.matmul %99, %5, %cst_50 {dimension_numbers = #tpu.dot_dimension_numbers<[1], [0], [0], [1], [0, 0, 1, 1], [], []>} : vector<8x128xf32>, vector<128x512xf32>, vector<8x512xf32> -> vector<8x512xf32>
    %101 = arith.addf %98, %100 : vector<8x512xf32>
    %c0_51 = arith.constant 0 : index
    %c0_52 = arith.constant 0 : index
    %102 = vector.load %arg8[%c0_51, %c0_52] : memref<8x128xf32, #tpu.memory_space<vmem>>, vector<8x128xf32>
    %103 = vector.extract_strided_slice %101 {offsets = [0, 0], sizes = [8, 128], strides = [1, 1]} : vector<8x512xf32> to vector<8x128xf32>
    %104 = arith.negf %103 : vector<8x128xf32>
    %105 = math.exp %104 : vector<8x128xf32>
    %cst_53 = arith.constant 1.000000e+00 : f32
    %106 = vector.broadcast %cst_53 : f32 to vector<8x128xf32>
    %107 = arith.addf %106, %105 : vector<8x128xf32>
    %108 = arith.divf %106, %107 : vector<8x128xf32>
    %109 = vector.extract_strided_slice %101 {offsets = [0, 128], sizes = [8, 128], strides = [1, 1]} : vector<8x512xf32> to vector<8x128xf32>
    %110 = arith.negf %109 : vector<8x128xf32>
    %111 = math.exp %110 : vector<8x128xf32>
    %cst_54 = arith.constant 1.000000e+00 : f32
    %112 = vector.broadcast %cst_54 : f32 to vector<8x128xf32>
    %113 = arith.addf %112, %111 : vector<8x128xf32>
    %114 = arith.divf %112, %113 : vector<8x128xf32>
    %115 = vector.extract_strided_slice %101 {offsets = [0, 256], sizes = [8, 128], strides = [1, 1]} : vector<8x512xf32> to vector<8x128xf32>
    %116 = math.tanh %115 : vector<8x128xf32>
    %117 = vector.extract_strided_slice %101 {offsets = [0, 384], sizes = [8, 128], strides = [1, 1]} : vector<8x512xf32> to vector<8x128xf32>
    %118 = arith.negf %117 : vector<8x128xf32>
    %119 = math.exp %118 : vector<8x128xf32>
    %cst_55 = arith.constant 1.000000e+00 : f32
    %120 = vector.broadcast %cst_55 : f32 to vector<8x128xf32>
    %121 = arith.addf %120, %119 : vector<8x128xf32>
    %122 = arith.divf %120, %121 : vector<8x128xf32>
    %123 = arith.mulf %114, %102 : vector<8x128xf32>
    %124 = arith.mulf %108, %116 : vector<8x128xf32>
    %125 = arith.addf %123, %124 : vector<8x128xf32>
    %126 = math.tanh %125 : vector<8x128xf32>
    %127 = arith.mulf %122, %126 : vector<8x128xf32>
    %c0_56 = arith.constant 0 : index
    %c0_57 = arith.constant 0 : index
    %128 = vector.load %arg7[%c0_56, %c0_57] : memref<8x256xf32, #tpu.memory_space<vmem>>, vector<8x128xf32>
    %129 = arith.select %96, %127, %128 : vector<8x128xi1>, vector<8x128xf32>
    %c0_58 = arith.constant 0 : index
    %c0_59 = arith.constant 0 : index
    %130 = vector.load %arg7[%c0_58, %c0_59] : memref<8x256xf32, #tpu.memory_space<vmem>>, vector<8x128xf32>
    tpu.vector_store %arg7[%c0_58, %c0_59], %129 {strides = array<i32>} : memref<8x256xf32, #tpu.memory_space<vmem>>, vector<8x128xf32>,
    %c0_60 = arith.constant 0 : index
    %c0_61 = arith.constant 0 : index
    %131 = vector.load %arg8[%c0_60, %c0_61] : memref<8x128xf32, #tpu.memory_space<vmem>>, vector<8x128xf32>
    %132 = arith.select %96, %125, %131 : vector<8x128xi1>, vector<8x128xf32>
    %c0_62 = arith.constant 0 : index
    %c0_63 = arith.constant 0 : index
    %133 = vector.load %arg8[%c0_62, %c0_63] : memref<8x128xf32, #tpu.memory_space<vmem>>, vector<8x128xf32>
    tpu.vector_store %arg8[%c0_62, %c0_63], %132 {strides = array<i32>} : memref<8x128xf32, #tpu.memory_space<vmem>>, vector<8x128xf32>,
    %c0_64 = arith.constant 0 : index
    %c0_65 = arith.constant 0 : index
    %134 = vector.load %arg7[%c0_64, %c0_65] : memref<8x256xf32, #tpu.memory_space<vmem>>, vector<8x256xf32>
    %cst_66 = arith.constant dense<0.000000e+00> : vector<8x512xf32>
    %135 = tpu.matmul %134, %6, %cst_66 {dimension_numbers = #tpu.dot_dimension_numbers<[1], [0], [0], [1], [0, 0, 1, 1], [], []>} : vector<8x256xf32>, vector<256x512xf32>, vector<8x512xf32> -> vector<8x512xf32>
    %136 = arith.addf %135, %9 : vector<8x512xf32>
    %c0_67 = arith.constant 0 : index
    %c0_68 = arith.constant 0 : index
    %137 = vector.load %arg9[%c0_67, %c0_68] : memref<8x128xf32, #tpu.memory_space<vmem>>, vector<8x128xf32>
    %138 = vector.extract_strided_slice %136 {offsets = [0, 0], sizes = [8, 128], strides = [1, 1]} : vector<8x512xf32> to vector<8x128xf32>
    %139 = arith.negf %138 : vector<8x128xf32>
    %140 = math.exp %139 : vector<8x128xf32>
    %cst_69 = arith.constant 1.000000e+00 : f32
    %141 = vector.broadcast %cst_69 : f32 to vector<8x128xf32>
    %142 = arith.addf %141, %140 : vector<8x128xf32>
    %143 = arith.divf %141, %142 : vector<8x128xf32>
    %144 = vector.extract_strided_slice %136 {offsets = [0, 128], sizes = [8, 128], strides = [1, 1]} : vector<8x512xf32> to vector<8x128xf32>
    %145 = arith.negf %144 : vector<8x128xf32>
    %146 = math.exp %145 : vector<8x128xf32>
    %cst_70 = arith.constant 1.000000e+00 : f32
    %147 = vector.broadcast %cst_70 : f32 to vector<8x128xf32>
    %148 = arith.addf %147, %146 : vector<8x128xf32>
    %149 = arith.divf %147, %148 : vector<8x128xf32>
    %150 = vector.extract_strided_slice %136 {offsets = [0, 256], sizes = [8, 128], strides = [1, 1]} : vector<8x512xf32> to vector<8x128xf32>
    %151 = math.tanh %150 : vector<8x128xf32>
    %152 = vector.extract_strided_slice %136 {offsets = [0, 384], sizes = [8, 128], strides = [1, 1]} : vector<8x512xf32> to vector<8x128xf32>
    %153 = arith.negf %152 : vector<8x128xf32>
    %154 = math.exp %153 : vector<8x128xf32>
    %cst_71 = arith.constant 1.000000e+00 : f32
    %155 = vector.broadcast %cst_71 : f32 to vector<8x128xf32>
    %156 = arith.addf %155, %154 : vector<8x128xf32>
    %157 = arith.divf %155, %156 : vector<8x128xf32>
    %158 = arith.mulf %149, %137 : vector<8x128xf32>
    %159 = arith.mulf %143, %151 : vector<8x128xf32>
    %160 = arith.addf %158, %159 : vector<8x128xf32>
    %161 = math.tanh %160 : vector<8x128xf32>
    %162 = arith.mulf %157, %161 : vector<8x128xf32>
    %c0_72 = arith.constant 0 : index
    %c128_73 = arith.constant 128 : index
    %163 = vector.load %arg7[%c0_72, %c128_73] : memref<8x256xf32, #tpu.memory_space<vmem>>, vector<8x128xf32>
    %164 = arith.select %96, %162, %163 : vector<8x128xi1>, vector<8x128xf32>
    %c0_74 = arith.constant 0 : index
    %c128_75 = arith.constant 128 : index
    %165 = vector.load %arg7[%c0_74, %c128_75] : memref<8x256xf32, #tpu.memory_space<vmem>>, vector<8x128xf32>
    tpu.vector_store %arg7[%c0_74, %c128_75], %164 {strides = array<i32>} : memref<8x256xf32, #tpu.memory_space<vmem>>, vector<8x128xf32>,
    %c0_76 = arith.constant 0 : index
    %c0_77 = arith.constant 0 : index
    %166 = vector.load %arg9[%c0_76, %c0_77] : memref<8x128xf32, #tpu.memory_space<vmem>>, vector<8x128xf32>
    %167 = arith.select %96, %160, %166 : vector<8x128xi1>, vector<8x128xf32>
    %c0_78 = arith.constant 0 : index
    %c0_79 = arith.constant 0 : index
    %168 = vector.load %arg9[%c0_78, %c0_79] : memref<8x128xf32, #tpu.memory_space<vmem>>, vector<8x128xf32>
    tpu.vector_store %arg9[%c0_78, %c0_79], %167 {strides = array<i32>} : memref<8x128xf32, #tpu.memory_space<vmem>>, vector<8x128xf32>,
    %cst_80 = arith.constant 0.000000e+00 : f32
    %169 = vector.broadcast %cst_80 : f32 to vector<8x128xf32>
    %170 = arith.select %96, %164, %169 : vector<8x128xi1>, vector<8x128xf32>
    %c1_81 = arith.constant 1 : index
    %c0_82 = arith.constant 0 : index
    %c0_83 = arith.constant 0 : index
    %171 = vector.load %arg6[%c1_81, %c0_82, %c0_83] : memref<4x8x128xf32, #tpu.memory_space<vmem>>, vector<1x8x128xf32>
    %172 = vector.shape_cast %171 : vector<1x8x128xf32> to vector<8x128xf32>
    %173 = vector.shape_cast %170 : vector<8x128xf32> to vector<1x8x128xf32>
    tpu.vector_store %arg6[%c1_81, %c0_82, %c0_83], %173 {strides = array<i32>} : memref<4x8x128xf32, #tpu.memory_space<vmem>>, vector<1x8x128xf32>,
    %c2_i32 = arith.constant 2 : i32
    %174 = arith.addi %3, %c2_i32 : i32
    %175 = vector.broadcast %174 : i32 to vector<8x1xi32>
    %176 = arith.cmpi sgt, %4, %175 : vector<8x1xi32>
    %177 = vector.shape_cast %176 : vector<8x1xi1> to vector<8x1xi1>
    %178 = vector.broadcast %177 : vector<8x1xi1> to vector<8x128xi1>
    %c2 = arith.constant 2 : index
    %c0_84 = arith.constant 0 : index
    %c0_85 = arith.constant 0 : index
    %179 = vector.load %arg2[%c2, %c0_84, %c0_85] : memref<4x8x512xf32, #tpu.memory_space<vmem>>, vector<1x8x512xf32>
    %180 = vector.shape_cast %179 : vector<1x8x512xf32> to vector<8x512xf32>
    %c0_86 = arith.constant 0 : index
    %c0_87 = arith.constant 0 : index
    %181 = vector.load %arg7[%c0_86, %c0_87] : memref<8x256xf32, #tpu.memory_space<vmem>>, vector<8x128xf32>
    %cst_88 = arith.constant dense<0.000000e+00> : vector<8x512xf32>
    %182 = tpu.matmul %181, %5, %cst_88 {dimension_numbers = #tpu.dot_dimension_numbers<[1], [0], [0], [1], [0, 0, 1, 1], [], []>} : vector<8x128xf32>, vector<128x512xf32>, vector<8x512xf32> -> vector<8x512xf32>
    %183 = arith.addf %180, %182 : vector<8x512xf32>
    %c0_89 = arith.constant 0 : index
    %c0_90 = arith.constant 0 : index
    %184 = vector.load %arg8[%c0_89, %c0_90] : memref<8x128xf32, #tpu.memory_space<vmem>>, vector<8x128xf32>
    %185 = vector.extract_strided_slice %183 {offsets = [0, 0], sizes = [8, 128], strides = [1, 1]} : vector<8x512xf32> to vector<8x128xf32>
    %186 = arith.negf %185 : vector<8x128xf32>
    %187 = math.exp %186 : vector<8x128xf32>
    %cst_91 = arith.constant 1.000000e+00 : f32
    %188 = vector.broadcast %cst_91 : f32 to vector<8x128xf32>
    %189 = arith.addf %188, %187 : vector<8x128xf32>
    %190 = arith.divf %188, %189 : vector<8x128xf32>
    %191 = vector.extract_strided_slice %183 {offsets = [0, 128], sizes = [8, 128], strides = [1, 1]} : vector<8x512xf32> to vector<8x128xf32>
    %192 = arith.negf %191 : vector<8x128xf32>
    %193 = math.exp %192 : vector<8x128xf32>
    %cst_92 = arith.constant 1.000000e+00 : f32
    %194 = vector.broadcast %cst_92 : f32 to vector<8x128xf32>
    %195 = arith.addf %194, %193 : vector<8x128xf32>
    %196 = arith.divf %194, %195 : vector<8x128xf32>
    %197 = vector.extract_strided_slice %183 {offsets = [0, 256], sizes = [8, 128], strides = [1, 1]} : vector<8x512xf32> to vector<8x128xf32>
    %198 = math.tanh %197 : vector<8x128xf32>
    %199 = vector.extract_strided_slice %183 {offsets = [0, 384], sizes = [8, 128], strides = [1, 1]} : vector<8x512xf32> to vector<8x128xf32>
    %200 = arith.negf %199 : vector<8x128xf32>
    %201 = math.exp %200 : vector<8x128xf32>
    %cst_93 = arith.constant 1.000000e+00 : f32
    %202 = vector.broadcast %cst_93 : f32 to vector<8x128xf32>
    %203 = arith.addf %202, %201 : vector<8x128xf32>
    %204 = arith.divf %202, %203 : vector<8x128xf32>
    %205 = arith.mulf %196, %184 : vector<8x128xf32>
    %206 = arith.mulf %190, %198 : vector<8x128xf32>
    %207 = arith.addf %205, %206 : vector<8x128xf32>
    %208 = math.tanh %207 : vector<8x128xf32>
    %209 = arith.mulf %204, %208 : vector<8x128xf32>
    %c0_94 = arith.constant 0 : index
    %c0_95 = arith.constant 0 : index
    %210 = vector.load %arg7[%c0_94, %c0_95] : memref<8x256xf32, #tpu.memory_space<vmem>>, vector<8x128xf32>
    %211 = arith.select %178, %209, %210 : vector<8x128xi1>, vector<8x128xf32>
    %c0_96 = arith.constant 0 : index
    %c0_97 = arith.constant 0 : index
    %212 = vector.load %arg7[%c0_96, %c0_97] : memref<8x256xf32, #tpu.memory_space<vmem>>, vector<8x128xf32>
    tpu.vector_store %arg7[%c0_96, %c0_97], %211 {strides = array<i32>} : memref<8x256xf32, #tpu.memory_space<vmem>>, vector<8x128xf32>,
    %c0_98 = arith.constant 0 : index
    %c0_99 = arith.constant 0 : index
    %213 = vector.load %arg8[%c0_98, %c0_99] : memref<8x128xf32, #tpu.memory_space<vmem>>, vector<8x128xf32>
    %214 = arith.select %178, %207, %213 : vector<8x128xi1>, vector<8x128xf32>
    %c0_100 = arith.constant 0 : index
    %c0_101 = arith.constant 0 : index
    %215 = vector.load %arg8[%c0_100, %c0_101] : memref<8x128xf32, #tpu.memory_space<vmem>>, vector<8x128xf32>
    tpu.vector_store %arg8[%c0_100, %c0_101], %214 {strides = array<i32>} : memref<8x128xf32, #tpu.memory_space<vmem>>, vector<8x128xf32>,
    %c0_102 = arith.constant 0 : index
    %c0_103 = arith.constant 0 : index
    %216 = vector.load %arg7[%c0_102, %c0_103] : memref<8x256xf32, #tpu.memory_space<vmem>>, vector<8x256xf32>
    %cst_104 = arith.constant dense<0.000000e+00> : vector<8x512xf32>
    %217 = tpu.matmul %216, %6, %cst_104 {dimension_numbers = #tpu.dot_dimension_numbers<[1], [0], [0], [1], [0, 0, 1, 1], [], []>} : vector<8x256xf32>, vector<256x512xf32>, vector<8x512xf32> -> vector<8x512xf32>
    %218 = arith.addf %217, %9 : vector<8x512xf32>
    %c0_105 = arith.constant 0 : index
    %c0_106 = arith.constant 0 : index
    %219 = vector.load %arg9[%c0_105, %c0_106] : memref<8x128xf32, #tpu.memory_space<vmem>>, vector<8x128xf32>
    %220 = vector.extract_strided_slice %218 {offsets = [0, 0], sizes = [8, 128], strides = [1, 1]} : vector<8x512xf32> to vector<8x128xf32>
    %221 = arith.negf %220 : vector<8x128xf32>
    %222 = math.exp %221 : vector<8x128xf32>
    %cst_107 = arith.constant 1.000000e+00 : f32
    %223 = vector.broadcast %cst_107 : f32 to vector<8x128xf32>
    %224 = arith.addf %223, %222 : vector<8x128xf32>
    %225 = arith.divf %223, %224 : vector<8x128xf32>
    %226 = vector.extract_strided_slice %218 {offsets = [0, 128], sizes = [8, 128], strides = [1, 1]} : vector<8x512xf32> to vector<8x128xf32>
    %227 = arith.negf %226 : vector<8x128xf32>
    %228 = math.exp %227 : vector<8x128xf32>
    %cst_108 = arith.constant 1.000000e+00 : f32
    %229 = vector.broadcast %cst_108 : f32 to vector<8x128xf32>
    %230 = arith.addf %229, %228 : vector<8x128xf32>
    %231 = arith.divf %229, %230 : vector<8x128xf32>
    %232 = vector.extract_strided_slice %218 {offsets = [0, 256], sizes = [8, 128], strides = [1, 1]} : vector<8x512xf32> to vector<8x128xf32>
    %233 = math.tanh %232 : vector<8x128xf32>
    %234 = vector.extract_strided_slice %218 {offsets = [0, 384], sizes = [8, 128], strides = [1, 1]} : vector<8x512xf32> to vector<8x128xf32>
    %235 = arith.negf %234 : vector<8x128xf32>
    %236 = math.exp %235 : vector<8x128xf32>
    %cst_109 = arith.constant 1.000000e+00 : f32
    %237 = vector.broadcast %cst_109 : f32 to vector<8x128xf32>
    %238 = arith.addf %237, %236 : vector<8x128xf32>
    %239 = arith.divf %237, %238 : vector<8x128xf32>
    %240 = arith.mulf %231, %219 : vector<8x128xf32>
    %241 = arith.mulf %225, %233 : vector<8x128xf32>
    %242 = arith.addf %240, %241 : vector<8x128xf32>
    %243 = math.tanh %242 : vector<8x128xf32>
    %244 = arith.mulf %239, %243 : vector<8x128xf32>
    %c0_110 = arith.constant 0 : index
    %c128_111 = arith.constant 128 : index
    %245 = vector.load %arg7[%c0_110, %c128_111] : memref<8x256xf32, #tpu.memory_space<vmem>>, vector<8x128xf32>
    %246 = arith.select %178, %244, %245 : vector<8x128xi1>, vector<8x128xf32>
    %c0_112 = arith.constant 0 : index
    %c128_113 = arith.constant 128 : index
    %247 = vector.load %arg7[%c0_112, %c128_113] : memref<8x256xf32, #tpu.memory_space<vmem>>, vector<8x128xf32>
    tpu.vector_store %arg7[%c0_112, %c128_113], %246 {strides = array<i32>} : memref<8x256xf32, #tpu.memory_space<vmem>>, vector<8x128xf32>,
    %c0_114 = arith.constant 0 : index
    %c0_115 = arith.constant 0 : index
    %248 = vector.load %arg9[%c0_114, %c0_115] : memref<8x128xf32, #tpu.memory_space<vmem>>, vector<8x128xf32>
    %249 = arith.select %178, %242, %248 : vector<8x128xi1>, vector<8x128xf32>
    %c0_116 = arith.constant 0 : index
    %c0_117 = arith.constant 0 : index
    %250 = vector.load %arg9[%c0_116, %c0_117] : memref<8x128xf32, #tpu.memory_space<vmem>>, vector<8x128xf32>
    tpu.vector_store %arg9[%c0_116, %c0_117], %249 {strides = array<i32>} : memref<8x128xf32, #tpu.memory_space<vmem>>, vector<8x128xf32>,
    %cst_118 = arith.constant 0.000000e+00 : f32
    %251 = vector.broadcast %cst_118 : f32 to vector<8x128xf32>
    %252 = arith.select %178, %246, %251 : vector<8x128xi1>, vector<8x128xf32>
    %c2_119 = arith.constant 2 : index
    %c0_120 = arith.constant 0 : index
    %c0_121 = arith.constant 0 : index
    %253 = vector.load %arg6[%c2_119, %c0_120, %c0_121] : memref<4x8x128xf32, #tpu.memory_space<vmem>>, vector<1x8x128xf32>
    %254 = vector.shape_cast %253 : vector<1x8x128xf32> to vector<8x128xf32>
    %255 = vector.shape_cast %252 : vector<8x128xf32> to vector<1x8x128xf32>
    tpu.vector_store %arg6[%c2_119, %c0_120, %c0_121], %255 {strides = array<i32>} : memref<4x8x128xf32, #tpu.memory_space<vmem>>, vector<1x8x128xf32>,
    %c3_i32 = arith.constant 3 : i32
    %256 = arith.addi %3, %c3_i32 : i32
    %257 = vector.broadcast %256 : i32 to vector<8x1xi32>
    %258 = arith.cmpi sgt, %4, %257 : vector<8x1xi32>
    %259 = vector.shape_cast %258 : vector<8x1xi1> to vector<8x1xi1>
    %260 = vector.broadcast %259 : vector<8x1xi1> to vector<8x128xi1>
    %c3 = arith.constant 3 : index
    %c0_122 = arith.constant 0 : index
    %c0_123 = arith.constant 0 : index
    %261 = vector.load %arg2[%c3, %c0_122, %c0_123] : memref<4x8x512xf32, #tpu.memory_space<vmem>>, vector<1x8x512xf32>
    %262 = vector.shape_cast %261 : vector<1x8x512xf32> to vector<8x512xf32>
    %c0_124 = arith.constant 0 : index
    %c0_125 = arith.constant 0 : index
    %263 = vector.load %arg7[%c0_124, %c0_125] : memref<8x256xf32, #tpu.memory_space<vmem>>, vector<8x128xf32>
    %cst_126 = arith.constant dense<0.000000e+00> : vector<8x512xf32>
    %264 = tpu.matmul %263, %5, %cst_126 {dimension_numbers = #tpu.dot_dimension_numbers<[1], [0], [0], [1], [0, 0, 1, 1], [], []>} : vector<8x128xf32>, vector<128x512xf32>, vector<8x512xf32> -> vector<8x512xf32>
    %265 = arith.addf %262, %264 : vector<8x512xf32>
    %c0_127 = arith.constant 0 : index
    %c0_128 = arith.constant 0 : index
    %266 = vector.load %arg8[%c0_127, %c0_128] : memref<8x128xf32, #tpu.memory_space<vmem>>, vector<8x128xf32>
    %267 = vector.extract_strided_slice %265 {offsets = [0, 0], sizes = [8, 128], strides = [1, 1]} : vector<8x512xf32> to vector<8x128xf32>
    %268 = arith.negf %267 : vector<8x128xf32>
    %269 = math.exp %268 : vector<8x128xf32>
    %cst_129 = arith.constant 1.000000e+00 : f32
    %270 = vector.broadcast %cst_129 : f32 to vector<8x128xf32>
    %271 = arith.addf %270, %269 : vector<8x128xf32>
    %272 = arith.divf %270, %271 : vector<8x128xf32>
    %273 = vector.extract_strided_slice %265 {offsets = [0, 128], sizes = [8, 128], strides = [1, 1]} : vector<8x512xf32> to vector<8x128xf32>
    %274 = arith.negf %273 : vector<8x128xf32>
    %275 = math.exp %274 : vector<8x128xf32>
    %cst_130 = arith.constant 1.000000e+00 : f32
    %276 = vector.broadcast %cst_130 : f32 to vector<8x128xf32>
    %277 = arith.addf %276, %275 : vector<8x128xf32>
    %278 = arith.divf %276, %277 : vector<8x128xf32>
    %279 = vector.extract_strided_slice %265 {offsets = [0, 256], sizes = [8, 128], strides = [1, 1]} : vector<8x512xf32> to vector<8x128xf32>
    %280 = math.tanh %279 : vector<8x128xf32>
    %281 = vector.extract_strided_slice %265 {offsets = [0, 384], sizes = [8, 128], strides = [1, 1]} : vector<8x512xf32> to vector<8x128xf32>
    %282 = arith.negf %281 : vector<8x128xf32>
    %283 = math.exp %282 : vector<8x128xf32>
    %cst_131 = arith.constant 1.000000e+00 : f32
    %284 = vector.broadcast %cst_131 : f32 to vector<8x128xf32>
    %285 = arith.addf %284, %283 : vector<8x128xf32>
    %286 = arith.divf %284, %285 : vector<8x128xf32>
    %287 = arith.mulf %278, %266 : vector<8x128xf32>
    %288 = arith.mulf %272, %280 : vector<8x128xf32>
    %289 = arith.addf %287, %288 : vector<8x128xf32>
    %290 = math.tanh %289 : vector<8x128xf32>
    %291 = arith.mulf %286, %290 : vector<8x128xf32>
    %c0_132 = arith.constant 0 : index
    %c0_133 = arith.constant 0 : index
    %292 = vector.load %arg7[%c0_132, %c0_133] : memref<8x256xf32, #tpu.memory_space<vmem>>, vector<8x128xf32>
    %293 = arith.select %260, %291, %292 : vector<8x128xi1>, vector<8x128xf32>
    %c0_134 = arith.constant 0 : index
    %c0_135 = arith.constant 0 : index
    %294 = vector.load %arg7[%c0_134, %c0_135] : memref<8x256xf32, #tpu.memory_space<vmem>>, vector<8x128xf32>
    tpu.vector_store %arg7[%c0_134, %c0_135], %293 {strides = array<i32>} : memref<8x256xf32, #tpu.memory_space<vmem>>, vector<8x128xf32>,
    %c0_136 = arith.constant 0 : index
    %c0_137 = arith.constant 0 : index
    %295 = vector.load %arg8[%c0_136, %c0_137] : memref<8x128xf32, #tpu.memory_space<vmem>>, vector<8x128xf32>
    %296 = arith.select %260, %289, %295 : vector<8x128xi1>, vector<8x128xf32>
    %c0_138 = arith.constant 0 : index
    %c0_139 = arith.constant 0 : index
    %297 = vector.load %arg8[%c0_138, %c0_139] : memref<8x128xf32, #tpu.memory_space<vmem>>, vector<8x128xf32>
    tpu.vector_store %arg8[%c0_138, %c0_139], %296 {strides = array<i32>} : memref<8x128xf32, #tpu.memory_space<vmem>>, vector<8x128xf32>,
    %c0_140 = arith.constant 0 : index
    %c0_141 = arith.constant 0 : index
    %298 = vector.load %arg7[%c0_140, %c0_141] : memref<8x256xf32, #tpu.memory_space<vmem>>, vector<8x256xf32>
    %cst_142 = arith.constant dense<0.000000e+00> : vector<8x512xf32>
    %299 = tpu.matmul %298, %6, %cst_142 {dimension_numbers = #tpu.dot_dimension_numbers<[1], [0], [0], [1], [0, 0, 1, 1], [], []>} : vector<8x256xf32>, vector<256x512xf32>, vector<8x512xf32> -> vector<8x512xf32>
    %300 = arith.addf %299, %9 : vector<8x512xf32>
    %c0_143 = arith.constant 0 : index
    %c0_144 = arith.constant 0 : index
    %301 = vector.load %arg9[%c0_143, %c0_144] : memref<8x128xf32, #tpu.memory_space<vmem>>, vector<8x128xf32>
    %302 = vector.extract_strided_slice %300 {offsets = [0, 0], sizes = [8, 128], strides = [1, 1]} : vector<8x512xf32> to vector<8x128xf32>
    %303 = arith.negf %302 : vector<8x128xf32>
    %304 = math.exp %303 : vector<8x128xf32>
    %cst_145 = arith.constant 1.000000e+00 : f32
    %305 = vector.broadcast %cst_145 : f32 to vector<8x128xf32>
    %306 = arith.addf %305, %304 : vector<8x128xf32>
    %307 = arith.divf %305, %306 : vector<8x128xf32>
    %308 = vector.extract_strided_slice %300 {offsets = [0, 128], sizes = [8, 128], strides = [1, 1]} : vector<8x512xf32> to vector<8x128xf32>
    %309 = arith.negf %308 : vector<8x128xf32>
    %310 = math.exp %309 : vector<8x128xf32>
    %cst_146 = arith.constant 1.000000e+00 : f32
    %311 = vector.broadcast %cst_146 : f32 to vector<8x128xf32>
    %312 = arith.addf %311, %310 : vector<8x128xf32>
    %313 = arith.divf %311, %312 : vector<8x128xf32>
    %314 = vector.extract_strided_slice %300 {offsets = [0, 256], sizes = [8, 128], strides = [1, 1]} : vector<8x512xf32> to vector<8x128xf32>
    %315 = math.tanh %314 : vector<8x128xf32>
    %316 = vector.extract_strided_slice %300 {offsets = [0, 384], sizes = [8, 128], strides = [1, 1]} : vector<8x512xf32> to vector<8x128xf32>
    %317 = arith.negf %316 : vector<8x128xf32>
    %318 = math.exp %317 : vector<8x128xf32>
    %cst_147 = arith.constant 1.000000e+00 : f32
    %319 = vector.broadcast %cst_147 : f32 to vector<8x128xf32>
    %320 = arith.addf %319, %318 : vector<8x128xf32>
    %321 = arith.divf %319, %320 : vector<8x128xf32>
    %322 = arith.mulf %313, %301 : vector<8x128xf32>
    %323 = arith.mulf %307, %315 : vector<8x128xf32>
    %324 = arith.addf %322, %323 : vector<8x128xf32>
    %325 = math.tanh %324 : vector<8x128xf32>
    %326 = arith.mulf %321, %325 : vector<8x128xf32>
    %c0_148 = arith.constant 0 : index
    %c128_149 = arith.constant 128 : index
    %327 = vector.load %arg7[%c0_148, %c128_149] : memref<8x256xf32, #tpu.memory_space<vmem>>, vector<8x128xf32>
    %328 = arith.select %260, %326, %327 : vector<8x128xi1>, vector<8x128xf32>
    %c0_150 = arith.constant 0 : index
    %c128_151 = arith.constant 128 : index
    %329 = vector.load %arg7[%c0_150, %c128_151] : memref<8x256xf32, #tpu.memory_space<vmem>>, vector<8x128xf32>
    tpu.vector_store %arg7[%c0_150, %c128_151], %328 {strides = array<i32>} : memref<8x256xf32, #tpu.memory_space<vmem>>, vector<8x128xf32>,
    %c0_152 = arith.constant 0 : index
    %c0_153 = arith.constant 0 : index
    %330 = vector.load %arg9[%c0_152, %c0_153] : memref<8x128xf32, #tpu.memory_space<vmem>>, vector<8x128xf32>
    %331 = arith.select %260, %324, %330 : vector<8x128xi1>, vector<8x128xf32>
    %c0_154 = arith.constant 0 : index
    %c0_155 = arith.constant 0 : index
    %332 = vector.load %arg9[%c0_154, %c0_155] : memref<8x128xf32, #tpu.memory_space<vmem>>, vector<8x128xf32>
    tpu.vector_store %arg9[%c0_154, %c0_155], %331 {strides = array<i32>} : memref<8x128xf32, #tpu.memory_space<vmem>>, vector<8x128xf32>,
    %cst_156 = arith.constant 0.000000e+00 : f32
    %333 = vector.broadcast %cst_156 : f32 to vector<8x128xf32>
    %334 = arith.select %260, %328, %333 : vector<8x128xi1>, vector<8x128xf32>
    %c3_157 = arith.constant 3 : index
    %c0_158 = arith.constant 0 : index
    %c0_159 = arith.constant 0 : index
    %335 = vector.load %arg6[%c3_157, %c0_158, %c0_159] : memref<4x8x128xf32, #tpu.memory_space<vmem>>, vector<1x8x128xf32>
    %336 = vector.shape_cast %335 : vector<1x8x128xf32> to vector<8x128xf32>
    %337 = vector.shape_cast %334 : vector<8x128xf32> to vector<1x8x128xf32>
    tpu.vector_store %arg6[%c3_157, %c0_158, %c0_159], %337 {strides = array<i32>} : memref<4x8x128xf32, #tpu.memory_space<vmem>>, vector<1x8x128xf32>,
    return
  }
  func.func @transform_0(%arg0: i32) -> (i32, i32) {
    %c0_i32 = arith.constant 0 : i32
    %c0_i32_0 = arith.constant 0 : i32
    %c0_i32_1 = arith.constant 0 : i32
    return %c0_i32, %c0_i32_0 : i32, i32
  }
  func.func @transform_1(%arg0: i32) -> (i32, i32, i32) {
    %c0_i32 = arith.constant 0 : i32
    %c0_i32_0 = arith.constant 0 : i32
    %c0_i32_1 = arith.constant 0 : i32
    return %arg0, %c0_i32, %c0_i32_0 : i32, i32, i32
  }
  func.func @transform_2(%arg0: i32) -> (i32, i32) {
    %c0_i32 = arith.constant 0 : i32
    %c0_i32_0 = arith.constant 0 : i32
    %c0_i32_1 = arith.constant 0 : i32
    return %c0_i32, %c0_i32_0 : i32, i32
  }
  func.func @transform_3(%arg0: i32) -> (i32, i32) {
    %c0_i32 = arith.constant 0 : i32
    %c0_i32_0 = arith.constant 0 : i32
    %c0_i32_1 = arith.constant 0 : i32
    return %c0_i32, %c0_i32_0 : i32, i32
  }
  func.func @transform_4(%arg0: i32) -> (i32, i32) {
    %c0_i32 = arith.constant 0 : i32
    %c0_i32_0 = arith.constant 0 : i32
    %c0_i32_1 = arith.constant 0 : i32
    return %c0_i32, %c0_i32_0 : i32, i32
  }
  func.func @transform_5(%arg0: i32) -> (i32, i32, i32) {
    %c0_i32 = arith.constant 0 : i32
    %c0_i32_0 = arith.constant 0 : i32
    %c0_i32_1 = arith.constant 0 : i32
    return %arg0, %c0_i32, %c0_i32_0 : i32, i32, i32
  }
}

</mosaic_0001>

<llo_original>
// kernel: _lstm2_pallas.1
$region0: #{_lstm2_pallas.1}
  #allocation0 [shape = 'u32[]', space=smem, size = 0x4, offset = 0x4, fixed_abs, tag = 'smem constant byte address 0x4 - core index']
  #allocation1 [shape = 'u32[72,128]{1,0:T(1,128)}', space=vmem, size = 0x9000, scoped, tag = 'internal scratch']
  #allocation2 [shape = 'f32[8,256]{1,0:T(8,128)}', space=vmem, size = 0x2000, scoped, tag = 'scratch operand']
  #allocation3 [shape = 'f32[8,128]{1,0:T(8,128)}', space=vmem, size = 0x1000, scoped, tag = 'scratch operand']
  #allocation4 [shape = 'f32[8,128]{1,0:T(8,128)}', space=vmem, size = 0x1000, scoped, tag = 'scratch operand']
  %s0 = inlined_call_operand.vmem [shape: s32[8,1], index: 0, kind: input, shape index: {}]
  %s1 = inlined_call_operand.hbm [shape: f32[8,8,512], index: 1, kind: input, shape index: {}]
  %s2 = inlined_call_operand.hbm [shape: f32[128,512], index: 2, kind: input, shape index: {}]
  %s3 = inlined_call_operand.hbm [shape: f32[256,512], index: 3, kind: input, shape index: {}]
  %s4 = inlined_call_operand.vmem [shape: f32[1,512], index: 4, kind: input, shape index: {}]
  %s5 = inlined_call_operand.hbm [shape: f32[8,8,128], index: 5, kind: output, shape index: {}]
  %s6 = sld [smem:[#allocation0]]
  $region69: #{_lstm2_pallas.1} parent=0
    _
  %s8 = ssub.s32 1, %s6
  %s9 = scalar_select 0, %s8, %s6
  $region1: #{_lstm2_pallas.1} parent=0
    #allocation5 [shape = 'u8[131072]{0}', space=vmem, size = 0x20000, scoped, tag = 'input window, operand 1']
    #allocation6 [shape = 's32[2]{0}', space=sflag, size = 0x8, scoped, tag = 'scoped memory for _lstm2_pallas.1']
    #allocation7 [shape = 's32[2]{0}', space=sflag, size = 0x8, scoped, tag = 'scoped memory for _lstm2_pallas.1']
    #allocation8 [shape = 'u8[262144]{0}', space=vmem, size = 0x40000, scoped, tag = 'input window, operand 2, single buffered']
    #allocation9 [shape = 's32[1]{0}', space=sflag, size = 0x4, scoped, tag = 'scoped memory for _lstm2_pallas.1']
    #allocation10 [shape = 'u8[524288]{0}', space=vmem, size = 0x80000, scoped, tag = 'input window, operand 3, single buffered']
    #allocation11 [shape = 'u8[32768]{0}', space=vmem, size = 0x8000, scoped, tag = 'output window, operand 0']
    %10 = vsyncpa [#allocation6], 0
    %s11 = scalar_lea.sflag [#allocation6], 1
    %12 = vsyncpa %s11, 0
    %13 = vsyncpa [#allocation9], 0
    %14 = vsyncpa [#allocation7], 0
    %s15 = scalar_lea.sflag [#allocation7], 1
    %16 = vsyncpa %s15, 0
    loop: start=0, step=1, limit=4
    $region2: #{_lstm2_pallas.1} parent=1 // loop_pre_header
      _
    $region3: #{_lstm2_pallas.1} parent=1 // loop_header
      %s18 = sphi 0, %s22
      %p19 = scmp.ge.s32.totalorder %s18, 4
      %s26 = sphi 0, %s26
      %s28 = sphi 0, %s26
      %s29 = sphi 0, %s28
      %s43 = sphi 0, %s29
      %s49 = sphi 0, %s51
      %s52 = sphi 0, %s49
      %s53 = sphi 0, %s52
      %s69 = sphi 0, %s53
      %s73 = sphi 0, %s73
      %s75 = sphi 0, %s73
      %s76 = sphi 0, %s75
      %s90 = sphi 0, %s76
      %s94 = sphi 0, %s94
      %s96 = sphi 0, %s94
      %s97 = sphi 0, %s96
      %s111 = sphi 0, %s97
      %s115 = sphi 0, %s115
      %s117 = sphi 0, %s115
      %s118 = sphi 0, %s117
      %s132 = sphi 0, %s118
      %s138 = sphi 0, %s140
      %s141 = sphi 0, %s138
      %s142 = sphi 0, %s141
      %s158 = sphi 0, %s142
    $region4: #{_lstm2_pallas.1} parent=1 // loop_header_branch
      %21 = sbr.rel (%p19) target = $region8
    $region5: #{_lstm2_pallas.1} parent=1 // loop_body
      %s23 = ssub.s32 %s18, 1
      %s24 = ssub.s32 %s18, 2
      %s25 = sadd.s32 %s18, 1
      %s27 = sadd.s32 %s26, 1
      %p30 = scmp.eq.s32.totalorder %s18, 1
      %p31 = scmp.ne.s32.totalorder %s26, %s28
      %p32 = scmp.eq.s32.totalorder %s18, 0
      %p33 = por %p31, %p32
      %p34 = scmp.ne.s32.totalorder %s26, %s28
      %p35 = scmp.eq.s32.totalorder %s23, 1
      %p36 = por %p34, %p35
      %p37 = scmp.ne.s32.totalorder %s28, %s29
      %p38 = scmp.eq.s32.totalorder %s23, 0
      %p39 = por %p37, %p38
      %p40 = scmp.ne.s32.totalorder %s28, %s29
      %p41 = scmp.eq.s32.totalorder %s24, 1
      %p42 = por %p40, %p41
      %p44 = scmp.ne.s32.totalorder %s29, %s43
      %p45 = scmp.eq.s32.totalorder %s24, 0
      %p46 = por %p44, %p45
      %s47 = ssub.s32 %s18, %s25
      %p48 = scmp.eq.s32.totalorder %s47, 0
      %s50 = sadd.s32 %s49, 1
      %s51 = scalar_select %p48, %s49, %s50
      %p54 = pneg %p48
      %p55 = scmp.eq.s32.totalorder %s18, 1
      %p56 = por %p54, %p55
      %p57 = scmp.ne.s32.totalorder %s49, %s52
      %p58 = scmp.eq.s32.totalorder %s18, 0
      %p59 = por %p57, %p58
      %p60 = scmp.ne.s32.totalorder %s49, %s52
      %p61 = scmp.eq.s32.totalorder %s23, 1
      %p62 = por %p60, %p61
      %p63 = scmp.ne.s32.totalorder %s52, %s53
      %p64 = scmp.eq.s32.totalorder %s23, 0
      %p65 = por %p63, %p64
      %p66 = scmp.ne.s32.totalorder %s52, %s53
      %p67 = scmp.eq.s32.totalorder %s24, 1
      %p68 = por %p66, %p67
      %p70 = scmp.ne.s32.totalorder %s53, %s69
      %p71 = scmp.eq.s32.totalorder %s24, 0
      %p72 = por %p70, %p71
      %s74 = sadd.s32 %s73, 1
      %p77 = scmp.eq.s32.totalorder %s18, 1
      %p78 = scmp.ne.s32.totalorder %s73, %s75
      %p79 = scmp.eq.s32.totalorder %s18, 0
      %p80 = por %p78, %p79
      %p81 = scmp.ne.s32.totalorder %s73, %s75
      %p82 = scmp.eq.s32.totalorder %s23, 1
      %p83 = por %p81, %p82
      %p84 = scmp.ne.s32.totalorder %s75, %s76
      %p85 = scmp.eq.s32.totalorder %s23, 0
      %p86 = por %p84, %p85
      %p87 = scmp.ne.s32.totalorder %s75, %s76
      %p88 = scmp.eq.s32.totalorder %s24, 1
      %p89 = por %p87, %p88
      %p91 = scmp.ne.s32.totalorder %s76, %s90
      %p92 = scmp.eq.s32.totalorder %s24, 0
      %p93 = por %p91, %p92
      %s95 = sadd.s32 %s94, 1
      %p98 = scmp.eq.s32.totalorder %s18, 1
      %p99 = scmp.ne.s32.totalorder %s94, %s96
      %p100 = scmp.eq.s32.totalorder %s18, 0
      %p101 = por %p99, %p100
      %p102 = scmp.ne.s32.totalorder %s94, %s96
      %p103 = scmp.eq.s32.totalorder %s23, 1
      %p104 = por %p102, %p103
      %p105 = scmp.ne.s32.totalorder %s96, %s97
      %p106 = scmp.eq.s32.totalorder %s23, 0
      %p107 = por %p105, %p106
      %p108 = scmp.ne.s32.totalorder %s96, %s97
      %p109 = scmp.eq.s32.totalorder %s24, 1
      %p110 = por %p108, %p109
      %p112 = scmp.ne.s32.totalorder %s97, %s111
      %p113 = scmp.eq.s32.totalorder %s24, 0
      %p114 = por %p112, %p113
      %s116 = sadd.s32 %s115, 1
      %p119 = scmp.eq.s32.totalorder %s18, 1
      %p120 = scmp.ne.s32.totalorder %s115, %s117
      %p121 = scmp.eq.s32.totalorder %s18, 0
      %p122 = por %p120, %p121
      %p123 = scmp.ne.s32.totalorder %s115, %s117
      %p124 = scmp.eq.s32.totalorder %s23, 1
      %p125 = por %p123, %p124
      %p126 = scmp.ne.s32.totalorder %s117, %s118
      %p127 = scmp.eq.s32.totalorder %s23, 0
      %p128 = por %p126, %p127
      %p129 = scmp.ne.s32.totalorder %s117, %s118
      %p130 = scmp.eq.s32.totalorder %s24, 1
      %p131 = por %p129, %p130
      %p133 = scmp.ne.s32.totalorder %s118, %s132
      %p134 = scmp.eq.s32.totalorder %s24, 0
      %p135 = por %p133, %p134
      %s136 = ssub.s32 %s18, %s25
      %p137 = scmp.eq.s32.totalorder %s136, 0
      %s139 = sadd.s32 %s138, 1
      %s140 = scalar_select %p137, %s138, %s139
      %p143 = pneg %p137
      %p144 = scmp.eq.s32.totalorder %s18, 1
      %p145 = por %p143, %p144
      %p146 = scmp.ne.s32.totalorder %s138, %s141
      %p147 = scmp.eq.s32.totalorder %s18, 0
      %p148 = por %p146, %p147
      %p149 = scmp.ne.s32.totalorder %s138, %s141
      %p150 = scmp.eq.s32.totalorder %s23, 1
      %p151 = por %p149, %p150
      %p152 = scmp.ne.s32.totalorder %s141, %s142
      %p153 = scmp.eq.s32.totalorder %s23, 0
      %p154 = por %p152, %p153
      %p155 = scmp.ne.s32.totalorder %s141, %s142
      %p156 = scmp.eq.s32.totalorder %s24, 1
      %p157 = por %p155, %p156
      %p159 = scmp.ne.s32.totalorder %s142, %s158
      %p160 = scmp.eq.s32.totalorder %s24, 0
      %p161 = por %p159, %p160
      %p162 = scmp.le.s32.totalorder 1, %s18
      %p163 = scmp.lt.s32.totalorder %s18, 3
      %p164 = pnand %p162, %p163
      %p165 = pneg %p164
      // Predicated region
      $region9: #{_lstm2_pallas.1} parent=5 // pred_check
        _
      $region10: #{_lstm2_pallas.1} parent=5 // pred_check_branch
        %167 = sbr.rel (%p164) target = $region12
      $region11: #{_lstm2_pallas.1} parent=5 // pred_region
        %s168 = ssub.s32 %s18, 1
        // Predicated region
        $region13: #{_lstm2_pallas.1} parent=11 // pred_check
          %p169 = pneg %p39
        $region14: #{_lstm2_pallas.1} parent=11 // pred_check_branch
          %171 = sbr.rel (%p169) target = $region16
        $region15: #{_lstm2_pallas.1} parent=11 // pred_region
          _
        $region16: #{_lstm2_pallas.1} parent=11 // pred_fallthru
          _
        // Predicated region
        $region17: #{_lstm2_pallas.1} parent=11 // pred_check
          %p172 = pneg %p86
        $region18: #{_lstm2_pallas.1} parent=11 // pred_check_branch
          %174 = sbr.rel (%p172) target = $region20
        $region19: #{_lstm2_pallas.1} parent=11 // pred_region
          %176 = vsyncadd [#allocation9], 0
          %s177 = sshll.u32 %s2, 4
          %s178 = int_to_ptr.hbm [resolvable:$true] %s177
          %s179 = sshll.u32 [#allocation8], 4
          %s180 = int_to_ptr.vmem [resolvable:$true] %s179
          %185 = dma.hbm_to_vmem [thread:$0]  %s178, 8192, %s180, [#allocation9], 512, 512, 32
        $region20: #{_lstm2_pallas.1} parent=11 // pred_fallthru
          _
        // Predicated region
        $region21: #{_lstm2_pallas.1} parent=11 // pred_check
          %p186 = pneg %p107
        $region22: #{_lstm2_pallas.1} parent=11 // pred_check_branch
          %188 = sbr.rel (%p186) target = $region24
        $region23: #{_lstm2_pallas.1} parent=11 // pred_region
          %190 = vsyncadd [#allocation9], 0
          %s191 = sshll.u32 %s3, 4
          %s192 = int_to_ptr.hbm [resolvable:$true] %s191
          %s193 = sshll.u32 [#allocation10], 4
          %s194 = int_to_ptr.vmem [resolvable:$true] %s193
          %199 = dma.hbm_to_vmem [thread:$0]  %s192, 16384, %s194, [#allocation9], 512, 512, 32
        $region24: #{_lstm2_pallas.1} parent=11 // pred_fallthru
          _
        // Predicated region
        $region25: #{_lstm2_pallas.1} parent=11 // pred_check
          %p200 = pneg %p128
        $region26: #{_lstm2_pallas.1} parent=11 // pred_check_branch
          %202 = sbr.rel (%p200) target = $region28
        $region27: #{_lstm2_pallas.1} parent=11 // pred_region
          _
        $region28: #{_lstm2_pallas.1} parent=11 // pred_fallthru
          _
      $region12: #{_lstm2_pallas.1} parent=5 // pred_fallthru
        _
      %p203 = scmp.lt.s32.totalorder %s18, 2
      // Predicated region
      $region29: #{_lstm2_pallas.1} parent=5 // pred_check
        %p204 = pneg %p203
      $region30: #{_lstm2_pallas.1} parent=5 // pred_check_branch
        %206 = sbr.rel (%p204) target = $region32
      $region31: #{_lstm2_pallas.1} parent=5 // pred_region
        // Predicated region
        $region33: #{_lstm2_pallas.1} parent=31 // pred_check
          %p207 = pneg %p59
        $region34: #{_lstm2_pallas.1} parent=31 // pred_check_branch
          %209 = sbr.rel (%p207) target = $region36
        $region35: #{_lstm2_pallas.1} parent=31 // pred_region
          %s210 = sand.u32 %s49, 1
          %s211 = scalar_lea.sflag [#allocation6], %s210
          %s212 = sand.u32 %s49, 1
          %s213 = smul.addr %s212, 128
          %s214 = scalar_lea.vmem [#allocation5], %s213
          %s215 = smul.u32 4, %s18
          %217 = vsyncadd %s211, 0
          %s218 = smul.addr %s215, 4
          %s219 = smul.addr %s218, 8
          %s220 = scalar_lea.hbm %s1, %s219
          %s221 = sshll.u32 %s220, 4
          %s222 = int_to_ptr.hbm [resolvable:$true] %s221
          %s223 = sshll.u32 %s214, 4
          %s224 = int_to_ptr.vmem [resolvable:$true] %s223
          %229 = dma.hbm_to_vmem [thread:$0]  %s222, 2048, %s224, %s211, 512, 512, 32
        $region36: #{_lstm2_pallas.1} parent=31 // pred_fallthru
          _
      $region32: #{_lstm2_pallas.1} parent=5 // pred_fallthru
        _
      %p230 = scmp.le.s32.totalorder 1, %s18
      %p231 = scmp.lt.s32.totalorder %s18, 3
      %p232 = pnand %p230, %p231
      %p233 = pneg %p232
      // Predicated region
      $region37: #{_lstm2_pallas.1} parent=5 // pred_check
        _
      $region38: #{_lstm2_pallas.1} parent=5 // pred_check_branch
        %235 = sbr.rel (%p232) target = $region40
      $region39: #{_lstm2_pallas.1} parent=5 // pred_region
        %s236 = ssub.s32 %s18, 1
        %s237 = sand.u32 %s52, 1
        %s238 = scalar_lea.sflag [#allocation6], %s237
        %s239 = sand.u32 %s52, 1
        %s240 = smul.addr %s239, 128
        %s241 = scalar_lea.vmem [#allocation5], %s240
        // Predicated region
        $region41: #{_lstm2_pallas.1} parent=39 // pred_check
          %p242 = pneg %p65
        $region42: #{_lstm2_pallas.1} parent=39 // pred_check_branch
          %244 = sbr.rel (%p242) target = $region44
        $region43: #{_lstm2_pallas.1} parent=39 // pred_region
          %246 = dma.done %s238, 2048
        $region44: #{_lstm2_pallas.1} parent=39 // pred_fallthru
          _
        // Predicated region
        $region45: #{_lstm2_pallas.1} parent=39 // pred_check
          %p247 = pneg %p86
        $region46: #{_lstm2_pallas.1} parent=39 // pred_check_branch
          %249 = sbr.rel (%p247) target = $region48
        $region47: #{_lstm2_pallas.1} parent=39 // pred_region
          %251 = dma.done [#allocation9], 8192
        $region48: #{_lstm2_pallas.1} parent=39 // pred_fallthru
          _
        // Predicated region
        $region49: #{_lstm2_pallas.1} parent=39 // pred_check
          %p252 = pneg %p107
        $region50: #{_lstm2_pallas.1} parent=39 // pred_check_branch
          %254 = sbr.rel (%p252) target = $region52
        $region51: #{_lstm2_pallas.1} parent=39 // pred_region
          %256 = dma.done [#allocation9], 16384
        $region52: #{_lstm2_pallas.1} parent=39 // pred_fallthru
          _
        %p257 = pneg %p39
        %p258 = pneg %p36
        %s259 = sand.u32 %s52, 1
        %s260 = scalar_lea.sflag [#allocation6], %s259
        %s261 = sand.u32 %s52, 1
        %s262 = smul.addr %s261, 128
        %s263 = scalar_lea.vmem [#allocation5], %s262
        %p264 = pneg %p65
        %p265 = pneg %p62
        %p266 = pneg %p86
        %p267 = pneg %p83
        %p268 = pneg %p107
        %p269 = pneg %p104
        %p270 = pneg %p128
        %p271 = pneg %p125
        %p272 = pneg %p154
        %p273 = pneg %p151
        %s274 = sand.u32 %s141, 1
        %s275 = scalar_lea.sflag [#allocation7], %s274
        %s276 = sand.u32 %s141, 1
        %s277 = smul.addr %s276, 32
        %s278 = scalar_lea.vmem [#allocation11], %s277
        %s279 = smul.u32 4, %s23
        %s280 = smul.u32 4, %s23
        %p281 = scmp.eq.s32.totalorder %s23, 0
        // Predicated region
        $region53: #{_lstm2_pallas.1} parent=39 // pred_check
          %p282 = pneg %p281
        $region54: #{_lstm2_pallas.1} parent=39 // pred_check_branch
          %284 = sbr.rel (%p282) target = $region56
        $region55: #{_lstm2_pallas.1} parent=39 // pred_region
          %285 = vst [vmem:[#allocation2] sm:$0xff] 0.0
          %286 = vst [vmem:[#allocation2 + $0x8] sm:$0xff] 0.0
          %287 = vst [vmem:[#allocation3] sm:$0xff] 0.0
          %288 = vst [vmem:[#allocation4] sm:$0xff] 0.0
        $region56: #{_lstm2_pallas.1} parent=39 // pred_fallthru
          _
        %s289 = smul.u32 %s23, 4
        %v290 = vld [vmem:[%s0] sm:$0xff]
        %v291 = vld [vmem:[#allocation8] sm:$0xff]
        %v292 = vld [vmem:[#allocation8 + $0x8] sm:$0xff]
        %v293 = vld [vmem:[#allocation8 + $0x10] sm:$0xff]
        %v294 = vld [vmem:[#allocation8 + $0x18] sm:$0xff]
        %v295 = vld [vmem:[#allocation8 + $0x20] sm:$0xff]
        %v296 = vld [vmem:[#allocation8 + $0x28] sm:$0xff]
        %v297 = vld [vmem:[#allocation8 + $0x30] sm:$0xff]
        %v298 = vld [vmem:[#allocation8 + $0x38] sm:$0xff]
        %v299 = vld [vmem:[#allocation8 + $0x40] sm:$0xff]
        %v300 = vld [vmem:[#allocation8 + $0x48] sm:$0xff]
        %v301 = vld [vmem:[#allocation8 + $0x50] sm:$0xff]
        %v302 = vld [vmem:[#allocation8 + $0x58] sm:$0xff]
        %v303 = vld [vmem:[#allocation8 + $0x60] sm:$0xff]
        %v304 = vld [vmem:[#allocation8 + $0x68] sm:$0xff]
        %v305 = vld [vmem:[#allocation8 + $0x70] sm:$0xff]
        %v306 = vld [vmem:[#allocation8 + $0x78] sm:$0xff]
        %v307 = vld [vmem:[#allocation8 + $0x80] sm:$0xff]
        %v308 = vld [vmem:[#allocation8 + $0x88] sm:$0xff]
        %v309 = vld [vmem:[#allocation8 + $0x90] sm:$0xff]
        %v310 = vld [vmem:[#allocation8 + $0x98] sm:$0xff]
        %v311 = vld [vmem:[#allocation8 + $0xa0] sm:$0xff]
        %v312 = vld [vmem:[#allocation8 + $0xa8] sm:$0xff]
        %v313 = vld [vmem:[#allocation8 + $0xb0] sm:$0xff]
        %v314 = vld [vmem:[#allocation8 + $0xb8] sm:$0xff]
        %v315 = vld [vmem:[#allocation8 + $0xc0] sm:$0xff]
        %v316 = vld [vmem:[#allocation8 + $0xc8] sm:$0xff]
        %v317 = vld [vmem:[#allocation8 + $0xd0] sm:$0xff]
        %v318 = vld [vmem:[#allocation8 + $0xd8] sm:$0xff]
        %v319 = vld [vmem:[#allocation8 + $0xe0] sm:$0xff]
        %v320 = vld [vmem:[#allocation8 + $0xe8] sm:$0xff]
        %v321 = vld [vmem:[#allocation8 + $0xf0] sm:$0xff]
        %v322 = vld [vmem:[#allocation8 + $0xf8] sm:$0xff]
        %v323 = vld [vmem:[#allocation8 + $0x100] sm:$0xff]
        %v324 = vld [vmem:[#allocation8 + $0x108] sm:$0xff]
        %v325 = vld [vmem:[#allocation8 + $0x110] sm:$0xff]
        %v326 = vld [vmem:[#allocation8 + $0x118] sm:$0xff]
        %v327 = vld [vmem:[#allocation8 + $0x120] sm:$0xff]
        %v328 = vld [vmem:[#allocation8 + $0x128] sm:$0xff]
        %v329 = vld [vmem:[#allocation8 + $0x130] sm:$0xff]
        %v330 = vld [vmem:[#allocation8 + $0x138] sm:$0xff]
        %v331 = vld [vmem:[#allocation8 + $0x140] sm:$0xff]
        %v332 = vld [vmem:[#allocation8 + $0x148] sm:$0xff]
        %v333 = vld [vmem:[#allocation8 + $0x150] sm:$0xff]
        %v334 = vld [vmem:[#allocation8 + $0x158] sm:$0xff]
        %v335 = vld [vmem:[#allocation8 + $0x160] sm:$0xff]
        %v336 = vld [vmem:[#allocation8 + $0x168] sm:$0xff]
        %v337 = vld [vmem:[#allocation8 + $0x170] sm:$0xff]
        %v338 = vld [vmem:[#allocation8 + $0x178] sm:$0xff]
        %v339 = vld [vmem:[#allocation8 + $0x180] sm:$0xff]
        %v340 = vld [vmem:[#allocation8 + $0x188] sm:$0xff]
        %v341 = vld [vmem:[#allocation8 + $0x190] sm:$0xff]
        %v342 = vld [vmem:[#allocation8 + $0x198] sm:$0xff]
        %v343 = vld [vmem:[#allocation8 + $0x1a0] sm:$0xff]
        %v344 = vld [vmem:[#allocation8 + $0x1a8] sm:$0xff]
        %v345 = vld [vmem:[#allocation8 + $0x1b0] sm:$0xff]
        %v346 = vld [vmem:[#allocation8 + $0x1b8] sm:$0xff]
        %v347 = vld [vmem:[#allocation8 + $0x1c0] sm:$0xff]
        %v348 = vld [vmem:[#allocation8 + $0x1c8] sm:$0xff]
        %v349 = vld [vmem:[#allocation8 + $0x1d0] sm:$0xff]
        %v350 = vld [vmem:[#allocation8 + $0x1d8] sm:$0xff]
        %v351 = vld [vmem:[#allocation8 + $0x1e0] sm:$0xff]
        %v352 = vld [vmem:[#allocation8 + $0x1e8] sm:$0xff]
        %v353 = vld [vmem:[#allocation8 + $0x1f0] sm:$0xff]
        %v354 = vld [vmem:[#allocation8 + $0x1f8] sm:$0xff]
        %v355 = vld [vmem:[#allocation10] sm:$0xff]
        %v356 = vld [vmem:[#allocation10 + $0x8] sm:$0xff]
        %v357 = vld [vmem:[#allocation10 + $0x10] sm:$0xff]
        %v358 = vld [vmem:[#allocation10 + $0x18] sm:$0xff]
        %v359 = vld [vmem:[#allocation10 + $0x20] sm:$0xff]
        %v360 = vld [vmem:[#allocation10 + $0x28] sm:$0xff]
        %v361 = vld [vmem:[#allocation10 + $0x30] sm:$0xff]
        %v362 = vld [vmem:[#allocation10 + $0x38] sm:$0xff]
        %v363 = vld [vmem:[#allocation10 + $0x40] sm:$0xff]
        %v364 = vld [vmem:[#allocation10 + $0x48] sm:$0xff]
        %v365 = vld [vmem:[#allocation10 + $0x50] sm:$0xff]
        %v366 = vld [vmem:[#allocation10 + $0x58] sm:$0xff]
        %v367 = vld [vmem:[#allocation10 + $0x60] sm:$0xff]
        %v368 = vld [vmem:[#allocation10 + $0x68] sm:$0xff]
        %v369 = vld [vmem:[#allocation10 + $0x70] sm:$0xff]
        %v370 = vld [vmem:[#allocation10 + $0x78] sm:$0xff]
        %v371 = vld [vmem:[#allocation10 + $0x80] sm:$0xff]
        %v372 = vld [vmem:[#allocation10 + $0x88] sm:$0xff]
        %v373 = vld [vmem:[#allocation10 + $0x90] sm:$0xff]
        %v374 = vld [vmem:[#allocation10 + $0x98] sm:$0xff]
        %v375 = vld [vmem:[#allocation10 + $0xa0] sm:$0xff]
        %v376 = vld [vmem:[#allocation10 + $0xa8] sm:$0xff]
        %v377 = vld [vmem:[#allocation10 + $0xb0] sm:$0xff]
        %v378 = vld [vmem:[#allocation10 + $0xb8] sm:$0xff]
        %v379 = vld [vmem:[#allocation10 + $0xc0] sm:$0xff]
        %v380 = vld [vmem:[#allocation10 + $0xc8] sm:$0xff]
        %v381 = vld [vmem:[#allocation10 + $0xd0] sm:$0xff]
        %v382 = vld [vmem:[#allocation10 + $0xd8] sm:$0xff]
        %v383 = vld [vmem:[#allocation10 + $0xe0] sm:$0xff]
        %v384 = vld [vmem:[#allocation10 + $0xe8] sm:$0xff]
        %v385 = vld [vmem:[#allocation10 + $0xf0] sm:$0xff]
        %v386 = vld [vmem:[#allocation10 + $0xf8] sm:$0xff]
        %v387 = vld [vmem:[#allocation10 + $0x100] sm:$0xff]
        %v388 = vld [vmem:[#allocation10 + $0x108] sm:$0xff]
        %v389 = vld [vmem:[#allocation10 + $0x110] sm:$0xff]
        %v390 = vld [vmem:[#allocation10 + $0x118] sm:$0xff]
        %v391 = vld [vmem:[#allocation10 + $0x120] sm:$0xff]
        %v392 = vld [vmem:[#allocation10 + $0x128] sm:$0xff]
        %v393 = vld [vmem:[#allocation10 + $0x130] sm:$0xff]
        %v394 = vld [vmem:[#allocation10 + $0x138] sm:$0xff]
        %v395 = vld [vmem:[#allocation10 + $0x140] sm:$0xff]
        %v396 = vld [vmem:[#allocation10 + $0x148] sm:$0xff]
        %v397 = vld [vmem:[#allocation10 + $0x150] sm:$0xff]
        %v398 = vld [vmem:[#allocation10 + $0x158] sm:$0xff]
        %v399 = vld [vmem:[#allocation10 + $0x160] sm:$0xff]
        %v400 = vld [vmem:[#allocation10 + $0x168] sm:$0xff]
        %v401 = vld [vmem:[#allocation10 + $0x170] sm:$0xff]
        %v402 = vld [vmem:[#allocation10 + $0x178] sm:$0xff]
        %v403 = vld [vmem:[#allocation10 + $0x180] sm:$0xff]
        %v404 = vld [vmem:[#allocation10 + $0x188] sm:$0xff]
        %v405 = vld [vmem:[#allocation10 + $0x190] sm:$0xff]
        %v406 = vld [vmem:[#allocation10 + $0x198] sm:$0xff]
        %v407 = vld [vmem:[#allocation10 + $0x1a0] sm:$0xff]
        %v408 = vld [vmem:[#allocation10 + $0x1a8] sm:$0xff]
        %v409 = vld [vmem:[#allocation10 + $0x1b0] sm:$0xff]
        %v410 = vld [vmem:[#allocation10 + $0x1b8] sm:$0xff]
        %v411 = vld [vmem:[#allocation10 + $0x1c0] sm:$0xff]
        %v412 = vld [vmem:[#allocation10 + $0x1c8] sm:$0xff]
        %v413 = vld [vmem:[#allocation10 + $0x1d0] sm:$0xff]
        %v414 = vld [vmem:[#allocation10 + $0x1d8] sm:$0xff]
        %v415 = vld [vmem:[#allocation10 + $0x1e0] sm:$0xff]
        %v416 = vld [vmem:[#allocation10 + $0x1e8] sm:$0xff]
        %v417 = vld [vmem:[#allocation10 + $0x1f0] sm:$0xff]
        %v418 = vld [vmem:[#allocation10 + $0x1f8] sm:$0xff]
        %v419 = vld [vmem:[#allocation10 + $0x200] sm:$0xff]
        %v420 = vld [vmem:[#allocation10 + $0x208] sm:$0xff]
        %v421 = vld [vmem:[#allocation10 + $0x210] sm:$0xff]
        %v422 = vld [vmem:[#allocation10 + $0x218] sm:$0xff]
        %v423 = vld [vmem:[#allocation10 + $0x220] sm:$0xff]
        %v424 = vld [vmem:[#allocation10 + $0x228] sm:$0xff]
        %v425 = vld [vmem:[#allocation10 + $0x230] sm:$0xff]
        %v426 = vld [vmem:[#allocation10 + $0x238] sm:$0xff]
        %v427 = vld [vmem:[#allocation10 + $0x240] sm:$0xff]
        %v428 = vld [vmem:[#allocation10 + $0x248] sm:$0xff]
        %v429 = vld [vmem:[#allocation10 + $0x250] sm:$0xff]
        %v430 = vld [vmem:[#allocation10 + $0x258] sm:$0xff]
        %v431 = vld [vmem:[#allocation10 + $0x260] sm:$0xff]
        %v432 = vld [vmem:[#allocation10 + $0x268] sm:$0xff]
        %v433 = vld [vmem:[#allocation10 + $0x270] sm:$0xff]
        %v434 = vld [vmem:[#allocation10 + $0x278] sm:$0xff]
        %v435 = vld [vmem:[#allocation10 + $0x280] sm:$0xff]
        %v436 = vld [vmem:[#allocation10 + $0x288] sm:$0xff]
        %v437 = vld [vmem:[#allocation10 + $0x290] sm:$0xff]
        %v438 = vld [vmem:[#allocation10 + $0x298] sm:$0xff]
        %v439 = vld [vmem:[#allocation10 + $0x2a0] sm:$0xff]
        %v440 = vld [vmem:[#allocation10 + $0x2a8] sm:$0xff]
        %v441 = vld [vmem:[#allocation10 + $0x2b0] sm:$0xff]
        %v442 = vld [vmem:[#allocation10 + $0x2b8] sm:$0xff]
        %v443 = vld [vmem:[#allocation10 + $0x2c0] sm:$0xff]
        %v444 = vld [vmem:[#allocation10 + $0x2c8] sm:$0xff]
        %v445 = vld [vmem:[#allocation10 + $0x2d0] sm:$0xff]
        %v446 = vld [vmem:[#allocation10 + $0x2d8] sm:$0xff]
        %v447 = vld [vmem:[#allocation10 + $0x2e0] sm:$0xff]
        %v448 = vld [vmem:[#allocation10 + $0x2e8] sm:$0xff]
        %v449 = vld [vmem:[#allocation10 + $0x2f0] sm:$0xff]
        %v450 = vld [vmem:[#allocation10 + $0x2f8] sm:$0xff]
        %v451 = vld [vmem:[#allocation10 + $0x300] sm:$0xff]
        %v452 = vld [vmem:[#allocation10 + $0x308] sm:$0xff]
        %v453 = vld [vmem:[#allocation10 + $0x310] sm:$0xff]
        %v454 = vld [vmem:[#allocation10 + $0x318] sm:$0xff]
        %v455 = vld [vmem:[#allocation10 + $0x320] sm:$0xff]
        %v456 = vld [vmem:[#allocation10 + $0x328] sm:$0xff]
        %v457 = vld [vmem:[#allocation10 + $0x330] sm:$0xff]
        %v458 = vld [vmem:[#allocation10 + $0x338] sm:$0xff]
        %v459 = vld [vmem:[#allocation10 + $0x340] sm:$0xff]
        %v460 = vld [vmem:[#allocation10 + $0x348] sm:$0xff]
        %v461 = vld [vmem:[#allocation10 + $0x350] sm:$0xff]
        %v462 = vld [vmem:[#allocation10 + $0x358] sm:$0xff]
        %v463 = vld [vmem:[#allocation10 + $0x360] sm:$0xff]
        %v464 = vld [vmem:[#allocation10 + $0x368] sm:$0xff]
        %v465 = vld [vmem:[#allocation10 + $0x370] sm:$0xff]
        %v466 = vld [vmem:[#allocation10 + $0x378] sm:$0xff]
        %v467 = vld [vmem:[#allocation10 + $0x380] sm:$0xff]
        %v468 = vld [vmem:[#allocation10 + $0x388] sm:$0xff]
        %v469 = vld [vmem:[#allocation10 + $0x390] sm:$0xff]
        %v470 = vld [vmem:[#allocation10 + $0x398] sm:$0xff]
        %v471 = vld [vmem:[#allocation10 + $0x3a0] sm:$0xff]
        %v472 = vld [vmem:[#allocation10 + $0x3a8] sm:$0xff]
        %v473 = vld [vmem:[#allocation10 + $0x3b0] sm:$0xff]
        %v474 = vld [vmem:[#allocation10 + $0x3b8] sm:$0xff]
        %v475 = vld [vmem:[#allocation10 + $0x3c0] sm:$0xff]
        %v476 = vld [vmem:[#allocation10 + $0x3c8] sm:$0xff]
        %v477 = vld [vmem:[#allocation10 + $0x3d0] sm:$0xff]
        %v478 = vld [vmem:[#allocation10 + $0x3d8] sm:$0xff]
        %v479 = vld [vmem:[#allocation10 + $0x3e0] sm:$0xff]
        %v480 = vld [vmem:[#allocation10 + $0x3e8] sm:$0xff]
        %v481 = vld [vmem:[#allocation10 + $0x3f0] sm:$0xff]
        %v482 = vld [vmem:[#allocation10 + $0x3f8] sm:$0xff]
        %v483 = vld [vmem:[%s4] sm:$0xf]
        %v485 = vperm.slane %v483, 0
        %v486 = vperm.slane %v483, 1
        %v487 = vperm.slane %v483, 2
        %v488 = vperm.slane %v483, 3
        %v493 = vstv %s289
        %vm494 = vcmp.gt.s32.totalorder %v290, %v493
        %v495 = vsel %vm494, 1, 0
        %496 = vset.pattern.permute.xlu0 0
        %497 = vperm.xlu0 %496, %v495
        %v498 = vpop.permute.xlu0 %497
        %vm499 = vcmp.eq.s32.totalorder %v498, 1
        %v500 = vld [vmem:[%s241] sm:$0xff]
        %v501 = vld [vmem:[%s241 + $0x8] sm:$0xff]
        %v502 = vld [vmem:[%s241 + $0x10] sm:$0xff]
        %v503 = vld [vmem:[%s241 + $0x18] sm:$0xff]
        %v504 = vld [vmem:[#allocation2] sm:$0xff]
        %505 = vmatpush.msra.mxu0 %v351
        %506 = vmatpush.msra.mxu0 %v347
        %507 = vmatpush.msra.mxu0 %v343
        %508 = vmatpush.msra.mxu0 %v339
        %509 = vmatpush.msra.mxu0 %v335
        %510 = vmatpush.msra.mxu0 %v331
        %511 = vmatpush.msra.mxu0 %v327
        %512 = vmatpush.msra.mxu0 %v323
        %513 = vmatpush.msra.mxu0 %v319
        %514 = vmatpush.msra.mxu0 %v315
        %515 = vmatpush.msra.mxu0 %v311
        %516 = vmatpush.msra.mxu0 %v307
        %517 = vmatpush.msra.mxu0 %v303
        %518 = vmatpush.msra.mxu0 %v299
        %519 = vmatpush.msra.mxu0 %v295
        %520 = vmatpush.msra.mxu0 %v291
        %521 = vmatmul.f32.gmra.mxu0 %v504
        %v522 = vpop.f32.mrf.mxu0
        %v523 = vadd.f32 0.0, %v522
        %524 = vdwg.mxu0
        %525 = vmatpush.msra.mxu0 %v352
        %526 = vmatpush.msra.mxu0 %v348
        %527 = vmatpush.msra.mxu0 %v344
        %528 = vmatpush.msra.mxu0 %v340
        %529 = vmatpush.msra.mxu0 %v336
        %530 = vmatpush.msra.mxu0 %v332
        %531 = vmatpush.msra.mxu0 %v328
        %532 = vmatpush.msra.mxu0 %v324
        %533 = vmatpush.msra.mxu0 %v320
        %534 = vmatpush.msra.mxu0 %v316
        %535 = vmatpush.msra.mxu0 %v312
        %536 = vmatpush.msra.mxu0 %v308
        %537 = vmatpush.msra.mxu0 %v304
        %538 = vmatpush.msra.mxu0 %v300
        %539 = vmatpush.msra.mxu0 %v296
        %540 = vmatpush.msra.mxu0 %v292
        %541 = vmatmul.f32.gmra.mxu0 %v504
        %v542 = vpop.f32.mrf.mxu0
        %v543 = vadd.f32 0.0, %v542
        %544 = vdwg.mxu0
        %545 = vmatpush.msra.mxu0 %v353
        %546 = vmatpush.msra.mxu0 %v349
        %547 = vmatpush.msra.mxu0 %v345
        %548 = vmatpush.msra.mxu0 %v341
        %549 = vmatpush.msra.mxu0 %v337
        %550 = vmatpush.msra.mxu0 %v333
        %551 = vmatpush.msra.mxu0 %v329
        %552 = vmatpush.msra.mxu0 %v325
        %553 = vmatpush.msra.mxu0 %v321
        %554 = vmatpush.msra.mxu0 %v317
        %555 = vmatpush.msra.mxu0 %v313
        %556 = vmatpush.msra.mxu0 %v309
        %557 = vmatpush.msra.mxu0 %v305
        %558 = vmatpush.msra.mxu0 %v301
        %559 = vmatpush.msra.mxu0 %v297
        %560 = vmatpush.msra.mxu0 %v293
        %561 = vmatmul.f32.gmra.mxu0 %v504
        %v562 = vpop.f32.mrf.mxu0
        %v563 = vadd.f32 0.0, %v562
        %564 = vdwg.mxu0
        %565 = vmatpush.msra.mxu0 %v354
        %566 = vmatpush.msra.mxu0 %v350
        %567 = vmatpush.msra.mxu0 %v346
        %568 = vmatpush.msra.mxu0 %v342
        %569 = vmatpush.msra.mxu0 %v338
        %570 = vmatpush.msra.mxu0 %v334
        %571 = vmatpush.msra.mxu0 %v330
        %572 = vmatpush.msra.mxu0 %v326
        %573 = vmatpush.msra.mxu0 %v322
        %574 = vmatpush.msra.mxu0 %v318
        %575 = vmatpush.msra.mxu0 %v314
        %576 = vmatpush.msra.mxu0 %v310
        %577 = vmatpush.msra.mxu0 %v306
        %578 = vmatpush.msra.mxu0 %v302
        %579 = vmatpush.msra.mxu0 %v298
        %580 = vmatpush.msra.mxu0 %v294
        %581 = vmatmul.f32.gmra.mxu0 %v504
        %v582 = vpop.f32.mrf.mxu0
        %v583 = vadd.f32 0.0, %v582
        %584 = vdwg.mxu0
        %v585 = vadd.f32 %v500, %v523
        %v586 = vadd.f32 %v501, %v543
        %v587 = vadd.f32 %v502, %v563
        %v588 = vadd.f32 %v503, %v583
        %v589 = vld [vmem:[#allocation3] sm:$0xff]
        %v590 = vxor.u32 %v585, 2147483648
        %v591 = vmul.f32 %v590, 1.442695
        %v592 = vpow.pop %v591
        %v593 = vadd.f32 %v592, 1.0
        %v594 = vrcp.pop %v593
        %v595 = vmul.f32 %v593, %v594
        %v596 = vsub.f32 1.0, %v595
        %v597 = vmul.f32 %v594, %v596
        %v598 = vadd.f32 %v594, %v597
        %vm599 = vweird.f32 %v593
        %vm600 = vweird.f32 %v594
        %vm601 = vmor %vm599, %vm600
        %v602 = vsel %vm601, %v594, %v598
        %v603 = vand.u32 2147483647, %v593
        %vm604 = vcmp.eq.f32.partialorder %v603, 8.507059e+37
        %v605 = vand.u32 %v593, 2147483648
        %v606 = vor.u32 1.1754944e-38, %v605
        %v607 = vsel %vm604, %v606, %v602
        %v608 = vmul.f32 1.0, %v607
        %v609 = vxor.u32 %v586, 2147483648
        %v610 = vmul.f32 %v609, 1.442695
        %v611 = vpow.pop %v610
        %v612 = vadd.f32 %v611, 1.0
        %v613 = vrcp.pop %v612
        %v614 = vmul.f32 %v612, %v613
        %v615 = vsub.f32 1.0, %v614
        %v616 = vmul.f32 %v613, %v615
        %v617 = vadd.f32 %v613, %v616
        %vm618 = vweird.f32 %v612
        %vm619 = vweird.f32 %v613
        %vm620 = vmor %vm618, %vm619
        %v621 = vsel %vm620, %v613, %v617
        %v622 = vand.u32 2147483647, %v612
        %vm623 = vcmp.eq.f32.partialorder %v622, 8.507059e+37
        %v624 = vand.u32 %v612, 2147483648
        %v625 = vor.u32 1.1754944e-38, %v624
        %v626 = vsel %vm623, %v625, %v621
        %v627 = vmul.f32 1.0, %v626
        %v628 = vtanh.pop %v587
        %v629 = vxor.u32 %v588, 2147483648
        %v630 = vmul.f32 %v629, 1.442695
        %v631 = vpow.pop %v630
        %v632 = vadd.f32 %v631, 1.0
        %v633 = vrcp.pop %v632
        %v634 = vmul.f32 %v632, %v633
        %v635 = vsub.f32 1.0, %v634
        %v636 = vmul.f32 %v633, %v635
        %v637 = vadd.f32 %v633, %v636
        %vm638 = vweird.f32 %v632
        %vm639 = vweird.f32 %v633
        %vm640 = vmor %vm638, %vm639
        %v641 = vsel %vm640, %v633, %v637
        %v642 = vand.u32 2147483647, %v632
        %vm643 = vcmp.eq.f32.partialorder %v642, 8.507059e+37
        %v644 = vand.u32 %v632, 2147483648
        %v645 = vor.u32 1.1754944e-38, %v644
        %v646 = vsel %vm643, %v645, %v641
        %v647 = vmul.f32 1.0, %v646
        %v648 = vmul.f32 %v627, %v589
        %v649 = vmul.f32 %v608, %v628
        %v650 = vadd.f32 %v648, %v649
        %v651 = vtanh.pop %v650
        %v652 = vmul.f32 %v647, %v651
        %v653 = vsel %vm499, %v652, %v504
        %654 = vst [vmem:[#allocation2] sm:$0xff] %v653
        %v655 = vld [vmem:[#allocation3] sm:$0xff]
        %v656 = vsel %vm499, %v650, %v655
        %657 = vst [vmem:[#allocation3] sm:$0xff] %v656
        %v658 = vld [vmem:[#allocation2] sm:$0xff]
        %v659 = vld [vmem:[#allocation2 + $0x8] sm:$0xff]
        %660 = vmatpush.msra.mxu0 %v415
        %661 = vmatpush.msra.mxu0 %v411
        %662 = vmatpush.msra.mxu0 %v407
        %663 = vmatpush.msra.mxu0 %v403
        %664 = vmatpush.msra.mxu0 %v399
        %665 = vmatpush.msra.mxu0 %v395
        %666 = vmatpush.msra.mxu0 %v391
        %667 = vmatpush.msra.mxu0 %v387
        %668 = vmatpush.msra.mxu0 %v383
        %669 = vmatpush.msra.mxu0 %v379
        %670 = vmatpush.msra.mxu0 %v375
        %671 = vmatpush.msra.mxu0 %v371
        %672 = vmatpush.msra.mxu0 %v367
        %673 = vmatpush.msra.mxu0 %v363
        %674 = vmatpush.msra.mxu0 %v359
        %675 = vmatpush.msra.mxu0 %v355
        %676 = vmatmul.f32.gmra.mxu0 %v658
        %v677 = vpop.f32.mrf.mxu0
        %v678 = vadd.f32 %v485, %v677
        %679 = vdwg.mxu0
        %680 = vmatpush.msra.mxu0 %v479
        %681 = vmatpush.msra.mxu0 %v475
        %682 = vmatpush.msra.mxu0 %v471
        %683 = vmatpush.msra.mxu0 %v467
        %684 = vmatpush.msra.mxu0 %v463
        %685 = vmatpush.msra.mxu0 %v459
        %686 = vmatpush.msra.mxu0 %v455
        %687 = vmatpush.msra.mxu0 %v451
        %688 = vmatpush.msra.mxu0 %v447
        %689 = vmatpush.msra.mxu0 %v443
        %690 = vmatpush.msra.mxu0 %v439
        %691 = vmatpush.msra.mxu0 %v435
        %692 = vmatpush.msra.mxu0 %v431
        %693 = vmatpush.msra.mxu0 %v427
        %694 = vmatpush.msra.mxu0 %v423
        %695 = vmatpush.msra.mxu0 %v419
        %696 = vmatmul.f32.gmra.mxu0 %v659
        %v697 = vpop.f32.mrf.mxu0
        %v698 = vadd.f32 %v678, %v697
        %699 = vdwg.mxu0
        %700 = vmatpush.msra.mxu0 %v416
        %701 = vmatpush.msra.mxu0 %v412
        %702 = vmatpush.msra.mxu0 %v408
        %703 = vmatpush.msra.mxu0 %v404
        %704 = vmatpush.msra.mxu0 %v400
        %705 = vmatpush.msra.mxu0 %v396
        %706 = vmatpush.msra.mxu0 %v392
        %707 = vmatpush.msra.mxu0 %v388
        %708 = vmatpush.msra.mxu0 %v384
        %709 = vmatpush.msra.mxu0 %v380
        %710 = vmatpush.msra.mxu0 %v376
        %711 = vmatpush.msra.mxu0 %v372
        %712 = vmatpush.msra.mxu0 %v368
        %713 = vmatpush.msra.mxu0 %v364
        %714 = vmatpush.msra.mxu0 %v360
        %715 = vmatpush.msra.mxu0 %v356
        %716 = vmatmul.f32.gmra.mxu0 %v658
        %v717 = vpop.f32.mrf.mxu0
        %v718 = vadd.f32 %v486, %v717
        %719 = vdwg.mxu0
        %720 = vmatpush.msra.mxu0 %v480
        %721 = vmatpush.msra.mxu0 %v476
        %722 = vmatpush.msra.mxu0 %v472
        %723 = vmatpush.msra.mxu0 %v468
        %724 = vmatpush.msra.mxu0 %v464
        %725 = vmatpush.msra.mxu0 %v460
        %726 = vmatpush.msra.mxu0 %v456
        %727 = vmatpush.msra.mxu0 %v452
        %728 = vmatpush.msra.mxu0 %v448
        %729 = vmatpush.msra.mxu0 %v444
        %730 = vmatpush.msra.mxu0 %v440
        %731 = vmatpush.msra.mxu0 %v436
        %732 = vmatpush.msra.mxu0 %v432
        %733 = vmatpush.msra.mxu0 %v428
        %734 = vmatpush.msra.mxu0 %v424
        %735 = vmatpush.msra.mxu0 %v420
        %736 = vmatmul.f32.gmra.mxu0 %v659
        %v737 = vpop.f32.mrf.mxu0
        %v738 = vadd.f32 %v718, %v737
        %739 = vdwg.mxu0
        %740 = vmatpush.msra.mxu0 %v417
        %741 = vmatpush.msra.mxu0 %v413
        %742 = vmatpush.msra.mxu0 %v409
        %743 = vmatpush.msra.mxu0 %v405
        %744 = vmatpush.msra.mxu0 %v401
        %745 = vmatpush.msra.mxu0 %v397
        %746 = vmatpush.msra.mxu0 %v393
        %747 = vmatpush.msra.mxu0 %v389
        %748 = vmatpush.msra.mxu0 %v385
        %749 = vmatpush.msra.mxu0 %v381
        %750 = vmatpush.msra.mxu0 %v377
        %751 = vmatpush.msra.mxu0 %v373
        %752 = vmatpush.msra.mxu0 %v369
        %753 = vmatpush.msra.mxu0 %v365
        %754 = vmatpush.msra.mxu0 %v361
        %755 = vmatpush.msra.mxu0 %v357
        %756 = vmatmul.f32.gmra.mxu0 %v658
        %v757 = vpop.f32.mrf.mxu0
        %v758 = vadd.f32 %v487, %v757
        %759 = vdwg.mxu0
        %760 = vmatpush.msra.mxu0 %v481
        %761 = vmatpush.msra.mxu0 %v477
        %762 = vmatpush.msra.mxu0 %v473
        %763 = vmatpush.msra.mxu0 %v469
        %764 = vmatpush.msra.mxu0 %v465
        %765 = vmatpush.msra.mxu0 %v461
        %766 = vmatpush.msra.mxu0 %v457
        %767 = vmatpush.msra.mxu0 %v453
        %768 = vmatpush.msra.mxu0 %v449
        %769 = vmatpush.msra.mxu0 %v445
        %770 = vmatpush.msra.mxu0 %v441
        %771 = vmatpush.msra.mxu0 %v437
        %772 = vmatpush.msra.mxu0 %v433
        %773 = vmatpush.msra.mxu0 %v429
        %774 = vmatpush.msra.mxu0 %v425
        %775 = vmatpush.msra.mxu0 %v421
        %776 = vmatmul.f32.gmra.mxu0 %v659
        %v777 = vpop.f32.mrf.mxu0
        %v778 = vadd.f32 %v758, %v777
        %779 = vdwg.mxu0
        %780 = vmatpush.msra.mxu0 %v418
        %781 = vmatpush.msra.mxu0 %v414
        %782 = vmatpush.msra.mxu0 %v410
        %783 = vmatpush.msra.mxu0 %v406
        %784 = vmatpush.msra.mxu0 %v402
        %785 = vmatpush.msra.mxu0 %v398
        %786 = vmatpush.msra.mxu0 %v394
        %787 = vmatpush.msra.mxu0 %v390
        %788 = vmatpush.msra.mxu0 %v386
        %789 = vmatpush.msra.mxu0 %v382
        %790 = vmatpush.msra.mxu0 %v378
        %791 = vmatpush.msra.mxu0 %v374
        %792 = vmatpush.msra.mxu0 %v370
        %793 = vmatpush.msra.mxu0 %v366
        %794 = vmatpush.msra.mxu0 %v362
        %795 = vmatpush.msra.mxu0 %v358
        %796 = vmatmul.f32.gmra.mxu0 %v658
        %v797 = vpop.f32.mrf.mxu0
        %v798 = vadd.f32 %v488, %v797
        %799 = vdwg.mxu0
        %800 = vmatpush.msra.mxu0 %v482
        %801 = vmatpush.msra.mxu0 %v478
        %802 = vmatpush.msra.mxu0 %v474
        %803 = vmatpush.msra.mxu0 %v470
        %804 = vmatpush.msra.mxu0 %v466
        %805 = vmatpush.msra.mxu0 %v462
        %806 = vmatpush.msra.mxu0 %v458
        %807 = vmatpush.msra.mxu0 %v454
        %808 = vmatpush.msra.mxu0 %v450
        %809 = vmatpush.msra.mxu0 %v446
        %810 = vmatpush.msra.mxu0 %v442
        %811 = vmatpush.msra.mxu0 %v438
        %812 = vmatpush.msra.mxu0 %v434
        %813 = vmatpush.msra.mxu0 %v430
        %814 = vmatpush.msra.mxu0 %v426
        %815 = vmatpush.msra.mxu0 %v422
        %816 = vmatmul.f32.gmra.mxu0 %v659
        %v817 = vpop.f32.mrf.mxu0
        %v818 = vadd.f32 %v798, %v817
        %819 = vdwg.mxu0
        %v820 = vld [vmem:[#allocation4] sm:$0xff]
        %v821 = vxor.u32 %v698, 2147483648
        %v822 = vmul.f32 %v821, 1.442695
        %v823 = vpow.pop %v822
        %v824 = vadd.f32 %v823, 1.0
        %v825 = vrcp.pop %v824
        %v826 = vmul.f32 %v824, %v825
        %v827 = vsub.f32 1.0, %v826
        %v828 = vmul.f32 %v825, %v827
        %v829 = vadd.f32 %v825, %v828
        %vm830 = vweird.f32 %v824
        %vm831 = vweird.f32 %v825
        %vm832 = vmor %vm830, %vm831
        %v833 = vsel %vm832, %v825, %v829
        %v834 = vand.u32 2147483647, %v824
        %vm835 = vcmp.eq.f32.partialorder %v834, 8.507059e+37
        %v836 = vand.u32 %v824, 2147483648
        %v837 = vor.u32 1.1754944e-38, %v836
        %v838 = vsel %vm835, %v837, %v833
        %v839 = vmul.f32 1.0, %v838
        %v840 = vxor.u32 %v738, 2147483648
        %v841 = vmul.f32 %v840, 1.442695
        %v842 = vpow.pop %v841
        %v843 = vadd.f32 %v842, 1.0
        %v844 = vrcp.pop %v843
        %v845 = vmul.f32 %v843, %v844
        %v846 = vsub.f32 1.0, %v845
        %v847 = vmul.f32 %v844, %v846
        %v848 = vadd.f32 %v844, %v847
        %vm849 = vweird.f32 %v843
        %vm850 = vweird.f32 %v844
        %vm851 = vmor %vm849, %vm850
        %v852 = vsel %vm851, %v844, %v848
        %v853 = vand.u32 2147483647, %v843
        %vm854 = vcmp.eq.f32.partialorder %v853, 8.507059e+37
        %v855 = vand.u32 %v843, 2147483648
        %v856 = vor.u32 1.1754944e-38, %v855
        %v857 = vsel %vm854, %v856, %v852
        %v858 = vmul.f32 1.0, %v857
        %v859 = vtanh.pop %v778
        %v860 = vxor.u32 %v818, 2147483648
        %v861 = vmul.f32 %v860, 1.442695
        %v862 = vpow.pop %v861
        %v863 = vadd.f32 %v862, 1.0
        %v864 = vrcp.pop %v863
        %v865 = vmul.f32 %v863, %v864
        %v866 = vsub.f32 1.0, %v865
        %v867 = vmul.f32 %v864, %v866
        %v868 = vadd.f32 %v864, %v867
        %vm869 = vweird.f32 %v863
        %vm870 = vweird.f32 %v864
        %vm871 = vmor %vm869, %vm870
        %v872 = vsel %vm871, %v864, %v868
        %v873 = vand.u32 2147483647, %v863
        %vm874 = vcmp.eq.f32.partialorder %v873, 8.507059e+37
        %v875 = vand.u32 %v863, 2147483648
        %v876 = vor.u32 1.1754944e-38, %v875
        %v877 = vsel %vm874, %v876, %v872
        %v878 = vmul.f32 1.0, %v877
        %v879 = vmul.f32 %v858, %v820
        %v880 = vmul.f32 %v839, %v859
        %v881 = vadd.f32 %v879, %v880
        %v882 = vtanh.pop %v881
        %v883 = vmul.f32 %v878, %v882
        %v884 = vsel %vm499, %v883, %v659
        %885 = vst [vmem:[#allocation2 + $0x8] sm:$0xff] %v884
        %v886 = vld [vmem:[#allocation4] sm:$0xff]
        %v887 = vsel %vm499, %v881, %v886
        %888 = vst [vmem:[#allocation4] sm:$0xff] %v887
        %v889 = vsel %vm499, %v883, 0.0
        %890 = vst [vmem:[%s278] sm:$0xff] %v889
        %s891 = sadd.s32 %s289, 1
        %v892 = vstv %s891
        %vm893 = vcmp.gt.s32.totalorder %v290, %v892
        %v894 = vsel %vm893, 1, 0
        %895 = vset.pattern.permute.xlu0 0
        %896 = vperm.xlu0 %895, %v894
        %v897 = vpop.permute.xlu0 %896
        %vm898 = vcmp.eq.s32.totalorder %v897, 1
        %s899 = scalar_lea.vmem %s241, 32 [#allocation5]
        %v900 = vld [vmem:[%s899] sm:$0xff]
        %v901 = vld [vmem:[%s899 + $0x8] sm:$0xff]
        %v902 = vld [vmem:[%s899 + $0x10] sm:$0xff]
        %v903 = vld [vmem:[%s899 + $0x18] sm:$0xff]
        %v904 = vld [vmem:[#allocation2] sm:$0xff]
        %905 = vmatpush.msra.mxu0 %v351
        %906 = vmatpush.msra.mxu0 %v347
        %907 = vmatpush.msra.mxu0 %v343
        %908 = vmatpush.msra.mxu0 %v339
        %909 = vmatpush.msra.mxu0 %v335
        %910 = vmatpush.msra.mxu0 %v331
        %911 = vmatpush.msra.mxu0 %v327
        %912 = vmatpush.msra.mxu0 %v323
        %913 = vmatpush.msra.mxu0 %v319
        %914 = vmatpush.msra.mxu0 %v315
        %915 = vmatpush.msra.mxu0 %v311
        %916 = vmatpush.msra.mxu0 %v307
        %917 = vmatpush.msra.mxu0 %v303
        %918 = vmatpush.msra.mxu0 %v299
        %919 = vmatpush.msra.mxu0 %v295
        %920 = vmatpush.msra.mxu0 %v291
        %921 = vmatmul.f32.gmra.mxu0 %v904
        %v922 = vpop.f32.mrf.mxu0
        %v923 = vadd.f32 0.0, %v922
        %924 = vdwg.mxu0
        %925 = vmatpush.msra.mxu0 %v352
        %926 = vmatpush.msra.mxu0 %v348
        %927 = vmatpush.msra.mxu0 %v344
        %928 = vmatpush.msra.mxu0 %v340
        %929 = vmatpush.msra.mxu0 %v336
        %930 = vmatpush.msra.mxu0 %v332
        %931 = vmatpush.msra.mxu0 %v328
        %932 = vmatpush.msra.mxu0 %v324
        %933 = vmatpush.msra.mxu0 %v320
        %934 = vmatpush.msra.mxu0 %v316
        %935 = vmatpush.msra.mxu0 %v312
        %936 = vmatpush.msra.mxu0 %v308
        %937 = vmatpush.msra.mxu0 %v304
        %938 = vmatpush.msra.mxu0 %v300
        %939 = vmatpush.msra.mxu0 %v296
        %940 = vmatpush.msra.mxu0 %v292
        %941 = vmatmul.f32.gmra.mxu0 %v904
        %v942 = vpop.f32.mrf.mxu0
        %v943 = vadd.f32 0.0, %v942
        %944 = vdwg.mxu0
        %945 = vmatpush.msra.mxu0 %v353
        %946 = vmatpush.msra.mxu0 %v349
        %947 = vmatpush.msra.mxu0 %v345
        %948 = vmatpush.msra.mxu0 %v341
        %949 = vmatpush.msra.mxu0 %v337
        %950 = vmatpush.msra.mxu0 %v333
        %951 = vmatpush.msra.mxu0 %v329
        %952 = vmatpush.msra.mxu0 %v325
        %953 = vmatpush.msra.mxu0 %v321
        %954 = vmatpush.msra.mxu0 %v317
        %955 = vmatpush.msra.mxu0 %v313
        %956 = vmatpush.msra.mxu0 %v309
        %957 = vmatpush.msra.mxu0 %v305
        %958 = vmatpush.msra.mxu0 %v301
        %959 = vmatpush.msra.mxu0 %v297
        %960 = vmatpush.msra.mxu0 %v293
        %961 = vmatmul.f32.gmra.mxu0 %v904
        %v962 = vpop.f32.mrf.mxu0
        %v963 = vadd.f32 0.0, %v962
        %964 = vdwg.mxu0
        %965 = vmatpush.msra.mxu0 %v354
        %966 = vmatpush.msra.mxu0 %v350
        %967 = vmatpush.msra.mxu0 %v346
        %968 = vmatpush.msra.mxu0 %v342
        %969 = vmatpush.msra.mxu0 %v338
        %970 = vmatpush.msra.mxu0 %v334
        %971 = vmatpush.msra.mxu0 %v330
        %972 = vmatpush.msra.mxu0 %v326
        %973 = vmatpush.msra.mxu0 %v322
        %974 = vmatpush.msra.mxu0 %v318
        %975 = vmatpush.msra.mxu0 %v314
        %976 = vmatpush.msra.mxu0 %v310
        %977 = vmatpush.msra.mxu0 %v306
        %978 = vmatpush.msra.mxu0 %v302
        %979 = vmatpush.msra.mxu0 %v298
        %980 = vmatpush.msra.mxu0 %v294
        %981 = vmatmul.f32.gmra.mxu0 %v904
        %v982 = vpop.f32.mrf.mxu0
        %v983 = vadd.f32 0.0, %v982
        %984 = vdwg.mxu0
        %v985 = vadd.f32 %v900, %v923
        %v986 = vadd.f32 %v901, %v943
        %v987 = vadd.f32 %v902, %v963
        %v988 = vadd.f32 %v903, %v983
        %v989 = vld [vmem:[#allocation3] sm:$0xff]
        %v990 = vxor.u32 %v985, 2147483648
        %v991 = vmul.f32 %v990, 1.442695
        %v992 = vpow.pop %v991
        %v993 = vadd.f32 %v992, 1.0
        %v994 = vrcp.pop %v993
        %v995 = vmul.f32 %v993, %v994
        %v996 = vsub.f32 1.0, %v995
        %v997 = vmul.f32 %v994, %v996
        %v998 = vadd.f32 %v994, %v997
        %vm999 = vweird.f32 %v993
        %vm1000 = vweird.f32 %v994
        %vm1001 = vmor %vm999, %vm1000
        %v1002 = vsel %vm1001, %v994, %v998
        %v1003 = vand.u32 2147483647, %v993
        %vm1004 = vcmp.eq.f32.partialorder %v1003, 8.507059e+37
        %v1005 = vand.u32 %v993, 2147483648
        %v1006 = vor.u32 1.1754944e-38, %v1005
        %v1007 = vsel %vm1004, %v1006, %v1002
        %v1008 = vmul.f32 1.0, %v1007
        %v1009 = vxor.u32 %v986, 2147483648
        %v1010 = vmul.f32 %v1009, 1.442695
        %v1011 = vpow.pop %v1010
        %v1012 = vadd.f32 %v1011, 1.0
        %v1013 = vrcp.pop %v1012
        %v1014 = vmul.f32 %v1012, %v1013
        %v1015 = vsub.f32 1.0, %v1014
        %v1016 = vmul.f32 %v1013, %v1015
        %v1017 = vadd.f32 %v1013, %v1016
        %vm1018 = vweird.f32 %v1012
        %vm1019 = vweird.f32 %v1013
        %vm1020 = vmor %vm1018, %vm1019
        %v1021 = vsel %vm1020, %v1013, %v1017
        %v1022 = vand.u32 2147483647, %v1012
        %vm1023 = vcmp.eq.f32.partialorder %v1022, 8.507059e+37
        %v1024 = vand.u32 %v1012, 2147483648
        %v1025 = vor.u32 1.1754944e-38, %v1024
        %v1026 = vsel %vm1023, %v1025, %v1021
        %v1027 = vmul.f32 1.0, %v1026
        %v1028 = vtanh.pop %v987
        %v1029 = vxor.u32 %v988, 2147483648
        %v1030 = vmul.f32 %v1029, 1.442695
        %v1031 = vpow.pop %v1030
        %v1032 = vadd.f32 %v1031, 1.0
        %v1033 = vrcp.pop %v1032
        %v1034 = vmul.f32 %v1032, %v1033
        %v1035 = vsub.f32 1.0, %v1034
        %v1036 = vmul.f32 %v1033, %v1035
        %v1037 = vadd.f32 %v1033, %v1036
        %vm1038 = vweird.f32 %v1032
        %vm1039 = vweird.f32 %v1033
        %vm1040 = vmor %vm1038, %vm1039
        %v1041 = vsel %vm1040, %v1033, %v1037
        %v1042 = vand.u32 2147483647, %v1032
        %vm1043 = vcmp.eq.f32.partialorder %v1042, 8.507059e+37
        %v1044 = vand.u32 %v1032, 2147483648
        %v1045 = vor.u32 1.1754944e-38, %v1044
        %v1046 = vsel %vm1043, %v1045, %v1041
        %v1047 = vmul.f32 1.0, %v1046
        %v1048 = vmul.f32 %v1027, %v989
        %v1049 = vmul.f32 %v1008, %v1028
        %v1050 = vadd.f32 %v1048, %v1049
        %v1051 = vtanh.pop %v1050
        %v1052 = vmul.f32 %v1047, %v1051
        %v1053 = vsel %vm898, %v1052, %v904
        %1054 = vst [vmem:[#allocation2] sm:$0xff] %v1053
        %v1055 = vld [vmem:[#allocation3] sm:$0xff]
        %v1056 = vsel %vm898, %v1050, %v1055
        %1057 = vst [vmem:[#allocation3] sm:$0xff] %v1056
        %v1058 = vld [vmem:[#allocation2] sm:$0xff]
        %v1059 = vld [vmem:[#allocation2 + $0x8] sm:$0xff]
        %1060 = vmatpush.msra.mxu0 %v415
        %1061 = vmatpush.msra.mxu0 %v411
        %1062 = vmatpush.msra.mxu0 %v407
        %1063 = vmatpush.msra.mxu0 %v403
        %1064 = vmatpush.msra.mxu0 %v399
        %1065 = vmatpush.msra.mxu0 %v395
        %1066 = vmatpush.msra.mxu0 %v391
        %1067 = vmatpush.msra.mxu0 %v387
        %1068 = vmatpush.msra.mxu0 %v383
        %1069 = vmatpush.msra.mxu0 %v379
        %1070 = vmatpush.msra.mxu0 %v375
        %1071 = vmatpush.msra.mxu0 %v371
        %1072 = vmatpush.msra.mxu0 %v367
        %1073 = vmatpush.msra.mxu0 %v363
        %1074 = vmatpush.msra.mxu0 %v359
        %1075 = vmatpush.msra.mxu0 %v355
        %1076 = vmatmul.f32.gmra.mxu0 %v1058
        %v1077 = vpop.f32.mrf.mxu0
        %v1078 = vadd.f32 %v485, %v1077
        %1079 = vdwg.mxu0
        %1080 = vmatpush.msra.mxu0 %v479
        %1081 = vmatpush.msra.mxu0 %v475
        %1082 = vmatpush.msra.mxu0 %v471
        %1083 = vmatpush.msra.mxu0 %v467
        %1084 = vmatpush.msra.mxu0 %v463
        %1085 = vmatpush.msra.mxu0 %v459
        %1086 = vmatpush.msra.mxu0 %v455
        %1087 = vmatpush.msra.mxu0 %v451
        %1088 = vmatpush.msra.mxu0 %v447
        %1089 = vmatpush.msra.mxu0 %v443
        %1090 = vmatpush.msra.mxu0 %v439
        %1091 = vmatpush.msra.mxu0 %v435
        %1092 = vmatpush.msra.mxu0 %v431
        %1093 = vmatpush.msra.mxu0 %v427
        %1094 = vmatpush.msra.mxu0 %v423
        %1095 = vmatpush.msra.mxu0 %v419
        %1096 = vmatmul.f32.gmra.mxu0 %v1059
        %v1097 = vpop.f32.mrf.mxu0
        %v1098 = vadd.f32 %v1078, %v1097
        %1099 = vdwg.mxu0
        %1100 = vmatpush.msra.mxu0 %v416
        %1101 = vmatpush.msra.mxu0 %v412
        %1102 = vmatpush.msra.mxu0 %v408
        %1103 = vmatpush.msra.mxu0 %v404
        %1104 = vmatpush.msra.mxu0 %v400
        %1105 = vmatpush.msra.mxu0 %v396
        %1106 = vmatpush.msra.mxu0 %v392
        %1107 = vmatpush.msra.mxu0 %v388
        %1108 = vmatpush.msra.mxu0 %v384
        %1109 = vmatpush.msra.mxu0 %v380
        %1110 = vmatpush.msra.mxu0 %v376
        %1111 = vmatpush.msra.mxu0 %v372
        %1112 = vmatpush.msra.mxu0 %v368
        %1113 = vmatpush.msra.mxu0 %v364
        %1114 = vmatpush.msra.mxu0 %v360
        %1115 = vmatpush.msra.mxu0 %v356
        %1116 = vmatmul.f32.gmra.mxu0 %v1058
        %v1117 = vpop.f32.mrf.mxu0
        %v1118 = vadd.f32 %v486, %v1117
        %1119 = vdwg.mxu0
        %1120 = vmatpush.msra.mxu0 %v480
        %1121 = vmatpush.msra.mxu0 %v476
        %1122 = vmatpush.msra.mxu0 %v472
        %1123 = vmatpush.msra.mxu0 %v468
        %1124 = vmatpush.msra.mxu0 %v464
        %1125 = vmatpush.msra.mxu0 %v460
        %1126 = vmatpush.msra.mxu0 %v456
        %1127 = vmatpush.msra.mxu0 %v452
        %1128 = vmatpush.msra.mxu0 %v448
        %1129 = vmatpush.msra.mxu0 %v444
        %1130 = vmatpush.msra.mxu0 %v440
        %1131 = vmatpush.msra.mxu0 %v436
        %1132 = vmatpush.msra.mxu0 %v432
        %1133 = vmatpush.msra.mxu0 %v428
        %1134 = vmatpush.msra.mxu0 %v424
        %1135 = vmatpush.msra.mxu0 %v420
        %1136 = vmatmul.f32.gmra.mxu0 %v1059
        %v1137 = vpop.f32.mrf.mxu0
        %v1138 = vadd.f32 %v1118, %v1137
        %1139 = vdwg.mxu0
        %1140 = vmatpush.msra.mxu0 %v417
        %1141 = vmatpush.msra.mxu0 %v413
        %1142 = vmatpush.msra.mxu0 %v409
        %1143 = vmatpush.msra.mxu0 %v405
        %1144 = vmatpush.msra.mxu0 %v401
        %1145 = vmatpush.msra.mxu0 %v397
        %1146 = vmatpush.msra.mxu0 %v393
        %1147 = vmatpush.msra.mxu0 %v389
        %1148 = vmatpush.msra.mxu0 %v385
        %1149 = vmatpush.msra.mxu0 %v381
        %1150 = vmatpush.msra.mxu0 %v377
        %1151 = vmatpush.msra.mxu0 %v373
        %1152 = vmatpush.msra.mxu0 %v369
        %1153 = vmatpush.msra.mxu0 %v365
        %1154 = vmatpush.msra.mxu0 %v361
        %1155 = vmatpush.msra.mxu0 %v357
        %1156 = vmatmul.f32.gmra.mxu0 %v1058
        %v1157 = vpop.f32.mrf.mxu0
        %v1158 = vadd.f32 %v487, %v1157
        %1159 = vdwg.mxu0
        %1160 = vmatpush.msra.mxu0 %v481
        %1161 = vmatpush.msra.mxu0 %v477
        %1162 = vmatpush.msra.mxu0 %v473
        %1163 = vmatpush.msra.mxu0 %v469
        %1164 = vmatpush.msra.mxu0 %v465
        %1165 = vmatpush.msra.mxu0 %v461
        %1166 = vmatpush.msra.mxu0 %v457
        %1167 = vmatpush.msra.mxu0 %v453
        %1168 = vmatpush.msra.mxu0 %v449
        %1169 = vmatpush.msra.mxu0 %v445
        %1170 = vmatpush.msra.mxu0 %v441
        %1171 = vmatpush.msra.mxu0 %v437
        %1172 = vmatpush.msra.mxu0 %v433
        %1173 = vmatpush.msra.mxu0 %v429
        %1174 = vmatpush.msra.mxu0 %v425
        %1175 = vmatpush.msra.mxu0 %v421
        %1176 = vmatmul.f32.gmra.mxu0 %v1059
        %v1177 = vpop.f32.mrf.mxu0
        %v1178 = vadd.f32 %v1158, %v1177
        %1179 = vdwg.mxu0
        %1180 = vmatpush.msra.mxu0 %v418
        %1181 = vmatpush.msra.mxu0 %v414
        %1182 = vmatpush.msra.mxu0 %v410
        %1183 = vmatpush.msra.mxu0 %v406
        %1184 = vmatpush.msra.mxu0 %v402
        %1185 = vmatpush.msra.mxu0 %v398
        %1186 = vmatpush.msra.mxu0 %v394
        %1187 = vmatpush.msra.mxu0 %v390
        %1188 = vmatpush.msra.mxu0 %v386
        %1189 = vmatpush.msra.mxu0 %v382
        %1190 = vmatpush.msra.mxu0 %v378
        %1191 = vmatpush.msra.mxu0 %v374
        %1192 = vmatpush.msra.mxu0 %v370
        %1193 = vmatpush.msra.mxu0 %v366
        %1194 = vmatpush.msra.mxu0 %v362
        %1195 = vmatpush.msra.mxu0 %v358
        %1196 = vmatmul.f32.gmra.mxu0 %v1058
        %v1197 = vpop.f32.mrf.mxu0
        %v1198 = vadd.f32 %v488, %v1197
        %1199 = vdwg.mxu0
        %1200 = vmatpush.msra.mxu0 %v482
        %1201 = vmatpush.msra.mxu0 %v478
        %1202 = vmatpush.msra.mxu0 %v474
        %1203 = vmatpush.msra.mxu0 %v470
        %1204 = vmatpush.msra.mxu0 %v466
        %1205 = vmatpush.msra.mxu0 %v462
        %1206 = vmatpush.msra.mxu0 %v458
        %1207 = vmatpush.msra.mxu0 %v454
        %1208 = vmatpush.msra.mxu0 %v450
        %1209 = vmatpush.msra.mxu0 %v446
        %1210 = vmatpush.msra.mxu0 %v442
        %1211 = vmatpush.msra.mxu0 %v438
        %1212 = vmatpush.msra.mxu0 %v434
        %1213 = vmatpush.msra.mxu0 %v430
        %1214 = vmatpush.msra.mxu0 %v426
        %1215 = vmatpush.msra.mxu0 %v422
        %1216 = vmatmul.f32.gmra.mxu0 %v1059
        %v1217 = vpop.f32.mrf.mxu0
        %v1218 = vadd.f32 %v1198, %v1217
        %1219 = vdwg.mxu0
        %v1220 = vld [vmem:[#allocation4] sm:$0xff]
        %v1221 = vxor.u32 %v1098, 2147483648
        %v1222 = vmul.f32 %v1221, 1.442695
        %v1223 = vpow.pop %v1222
        %v1224 = vadd.f32 %v1223, 1.0
        %v1225 = vrcp.pop %v1224
        %v1226 = vmul.f32 %v1224, %v1225
        %v1227 = vsub.f32 1.0, %v1226
        %v1228 = vmul.f32 %v1225, %v1227
        %v1229 = vadd.f32 %v1225, %v1228
        %vm1230 = vweird.f32 %v1224
        %vm1231 = vweird.f32 %v1225
        %vm1232 = vmor %vm1230, %vm1231
        %v1233 = vsel %vm1232, %v1225, %v1229
        %v1234 = vand.u32 2147483647, %v1224
        %vm1235 = vcmp.eq.f32.partialorder %v1234, 8.507059e+37
        %v1236 = vand.u32 %v1224, 2147483648
        %v1237 = vor.u32 1.1754944e-38, %v1236
        %v1238 = vsel %vm1235, %v1237, %v1233
        %v1239 = vmul.f32 1.0, %v1238
        %v1240 = vxor.u32 %v1138, 2147483648
        %v1241 = vmul.f32 %v1240, 1.442695
        %v1242 = vpow.pop %v1241
        %v1243 = vadd.f32 %v1242, 1.0
        %v1244 = vrcp.pop %v1243
        %v1245 = vmul.f32 %v1243, %v1244
        %v1246 = vsub.f32 1.0, %v1245
        %v1247 = vmul.f32 %v1244, %v1246
        %v1248 = vadd.f32 %v1244, %v1247
        %vm1249 = vweird.f32 %v1243
        %vm1250 = vweird.f32 %v1244
        %vm1251 = vmor %vm1249, %vm1250
        %v1252 = vsel %vm1251, %v1244, %v1248
        %v1253 = vand.u32 2147483647, %v1243
        %vm1254 = vcmp.eq.f32.partialorder %v1253, 8.507059e+37
        %v1255 = vand.u32 %v1243, 2147483648
        %v1256 = vor.u32 1.1754944e-38, %v1255
        %v1257 = vsel %vm1254, %v1256, %v1252
        %v1258 = vmul.f32 1.0, %v1257
        %v1259 = vtanh.pop %v1178
        %v1260 = vxor.u32 %v1218, 2147483648
        %v1261 = vmul.f32 %v1260, 1.442695
        %v1262 = vpow.pop %v1261
        %v1263 = vadd.f32 %v1262, 1.0
        %v1264 = vrcp.pop %v1263
        %v1265 = vmul.f32 %v1263, %v1264
        %v1266 = vsub.f32 1.0, %v1265
        %v1267 = vmul.f32 %v1264, %v1266
        %v1268 = vadd.f32 %v1264, %v1267
        %vm1269 = vweird.f32 %v1263
        %vm1270 = vweird.f32 %v1264
        %vm1271 = vmor %vm1269, %vm1270
        %v1272 = vsel %vm1271, %v1264, %v1268
        %v1273 = vand.u32 2147483647, %v1263
        %vm1274 = vcmp.eq.f32.partialorder %v1273, 8.507059e+37
        %v1275 = vand.u32 %v1263, 2147483648
        %v1276 = vor.u32 1.1754944e-38, %v1275
        %v1277 = vsel %vm1274, %v1276, %v1272
        %v1278 = vmul.f32 1.0, %v1277
        %v1279 = vmul.f32 %v1258, %v1220
        %v1280 = vmul.f32 %v1239, %v1259
        %v1281 = vadd.f32 %v1279, %v1280
        %v1282 = vtanh.pop %v1281
        %v1283 = vmul.f32 %v1278, %v1282
        %v1284 = vsel %vm898, %v1283, %v1059
        %1285 = vst [vmem:[#allocation2 + $0x8] sm:$0xff] %v1284
        %v1286 = vld [vmem:[#allocation4] sm:$0xff]
        %v1287 = vsel %vm898, %v1281, %v1286
        %1288 = vst [vmem:[#allocation4] sm:$0xff] %v1287
        %v1289 = vsel %vm898, %v1283, 0.0
        %s1290 = scalar_lea.vmem %s278, 8 [#allocation11]
        %1291 = vst [vmem:[%s1290] sm:$0xff] %v1289
        %s1292 = sadd.s32 %s289, 2
        %v1293 = vstv %s1292
        %vm1294 = vcmp.gt.s32.totalorder %v290, %v1293
        %v1295 = vsel %vm1294, 1, 0
        %1296 = vset.pattern.permute.xlu0 0
        %1297 = vperm.xlu0 %1296, %v1295
        %v1298 = vpop.permute.xlu0 %1297
        %vm1299 = vcmp.eq.s32.totalorder %v1298, 1
        %s1300 = scalar_lea.vmem %s241, 64 [#allocation5]
        %v1301 = vld [vmem:[%s1300] sm:$0xff]
        %v1302 = vld [vmem:[%s1300 + $0x8] sm:$0xff]
        %v1303 = vld [vmem:[%s1300 + $0x10] sm:$0xff]
        %v1304 = vld [vmem:[%s1300 + $0x18] sm:$0xff]
        %v1305 = vld [vmem:[#allocation2] sm:$0xff]
        %1306 = vmatpush.msra.mxu0 %v351
        %1307 = vmatpush.msra.mxu0 %v347
        %1308 = vmatpush.msra.mxu0 %v343
        %1309 = vmatpush.msra.mxu0 %v339
        %1310 = vmatpush.msra.mxu0 %v335
        %1311 = vmatpush.msra.mxu0 %v331
        %1312 = vmatpush.msra.mxu0 %v327
        %1313 = vmatpush.msra.mxu0 %v323
        %1314 = vmatpush.msra.mxu0 %v319
        %1315 = vmatpush.msra.mxu0 %v315
        %1316 = vmatpush.msra.mxu0 %v311
        %1317 = vmatpush.msra.mxu0 %v307
        %1318 = vmatpush.msra.mxu0 %v303
        %1319 = vmatpush.msra.mxu0 %v299
        %1320 = vmatpush.msra.mxu0 %v295
        %1321 = vmatpush.msra.mxu0 %v291
        %1322 = vmatmul.f32.gmra.mxu0 %v1305
        %v1323 = vpop.f32.mrf.mxu0
        %v1324 = vadd.f32 0.0, %v1323
        %1325 = vdwg.mxu0
        %1326 = vmatpush.msra.mxu0 %v352
        %1327 = vmatpush.msra.mxu0 %v348
        %1328 = vmatpush.msra.mxu0 %v344
        %1329 = vmatpush.msra.mxu0 %v340
        %1330 = vmatpush.msra.mxu0 %v336
        %1331 = vmatpush.msra.mxu0 %v332
        %1332 = vmatpush.msra.mxu0 %v328
        %1333 = vmatpush.msra.mxu0 %v324
        %1334 = vmatpush.msra.mxu0 %v320
        %1335 = vmatpush.msra.mxu0 %v316
        %1336 = vmatpush.msra.mxu0 %v312
        %1337 = vmatpush.msra.mxu0 %v308
        %1338 = vmatpush.msra.mxu0 %v304
        %1339 = vmatpush.msra.mxu0 %v300
        %1340 = vmatpush.msra.mxu0 %v296
        %1341 = vmatpush.msra.mxu0 %v292
        %1342 = vmatmul.f32.gmra.mxu0 %v1305
        %v1343 = vpop.f32.mrf.mxu0
        %v1344 = vadd.f32 0.0, %v1343
        %1345 = vdwg.mxu0
        %1346 = vmatpush.msra.mxu0 %v353
        %1347 = vmatpush.msra.mxu0 %v349
        %1348 = vmatpush.msra.mxu0 %v345
        %1349 = vmatpush.msra.mxu0 %v341
        %1350 = vmatpush.msra.mxu0 %v337
        %1351 = vmatpush.msra.mxu0 %v333
        %1352 = vmatpush.msra.mxu0 %v329
        %1353 = vmatpush.msra.mxu0 %v325
        %1354 = vmatpush.msra.mxu0 %v321
        %1355 = vmatpush.msra.mxu0 %v317
        %1356 = vmatpush.msra.mxu0 %v313
        %1357 = vmatpush.msra.mxu0 %v309
        %1358 = vmatpush.msra.mxu0 %v305
        %1359 = vmatpush.msra.mxu0 %v301
        %1360 = vmatpush.msra.mxu0 %v297
        %1361 = vmatpush.msra.mxu0 %v293
        %1362 = vmatmul.f32.gmra.mxu0 %v1305
        %v1363 = vpop.f32.mrf.mxu0
        %v1364 = vadd.f32 0.0, %v1363
        %1365 = vdwg.mxu0
        %1366 = vmatpush.msra.mxu0 %v354
        %1367 = vmatpush.msra.mxu0 %v350
        %1368 = vmatpush.msra.mxu0 %v346
        %1369 = vmatpush.msra.mxu0 %v342
        %1370 = vmatpush.msra.mxu0 %v338
        %1371 = vmatpush.msra.mxu0 %v334
        %1372 = vmatpush.msra.mxu0 %v330
        %1373 = vmatpush.msra.mxu0 %v326
        %1374 = vmatpush.msra.mxu0 %v322
        %1375 = vmatpush.msra.mxu0 %v318
        %1376 = vmatpush.msra.mxu0 %v314
        %1377 = vmatpush.msra.mxu0 %v310
        %1378 = vmatpush.msra.mxu0 %v306
        %1379 = vmatpush.msra.mxu0 %v302
        %1380 = vmatpush.msra.mxu0 %v298
        %1381 = vmatpush.msra.mxu0 %v294
        %1382 = vmatmul.f32.gmra.mxu0 %v1305
        %v1383 = vpop.f32.mrf.mxu0
        %v1384 = vadd.f32 0.0, %v1383
        %1385 = vdwg.mxu0
        %v1386 = vadd.f32 %v1301, %v1324
        %v1387 = vadd.f32 %v1302, %v1344
        %v1388 = vadd.f32 %v1303, %v1364
        %v1389 = vadd.f32 %v1304, %v1384
        %v1390 = vld [vmem:[#allocation3] sm:$0xff]
        %v1391 = vxor.u32 %v1386, 2147483648
        %v1392 = vmul.f32 %v1391, 1.442695
        %v1393 = vpow.pop %v1392
        %v1394 = vadd.f32 %v1393, 1.0
        %v1395 = vrcp.pop %v1394
        %v1396 = vmul.f32 %v1394, %v1395
        %v1397 = vsub.f32 1.0, %v1396
        %v1398 = vmul.f32 %v1395, %v1397
        %v1399 = vadd.f32 %v1395, %v1398
        %vm1400 = vweird.f32 %v1394
        %vm1401 = vweird.f32 %v1395
        %vm1402 = vmor %vm1400, %vm1401
        %v1403 = vsel %vm1402, %v1395, %v1399
        %v1404 = vand.u32 2147483647, %v1394
        %vm1405 = vcmp.eq.f32.partialorder %v1404, 8.507059e+37
        %v1406 = vand.u32 %v1394, 2147483648
        %v1407 = vor.u32 1.1754944e-38, %v1406
        %v1408 = vsel %vm1405, %v1407, %v1403
        %v1409 = vmul.f32 1.0, %v1408
        %v1410 = vxor.u32 %v1387, 2147483648
        %v1411 = vmul.f32 %v1410, 1.442695
        %v1412 = vpow.pop %v1411
        %v1413 = vadd.f32 %v1412, 1.0
        %v1414 = vrcp.pop %v1413
        %v1415 = vmul.f32 %v1413, %v1414
        %v1416 = vsub.f32 1.0, %v1415
        %v1417 = vmul.f32 %v1414, %v1416
        %v1418 = vadd.f32 %v1414, %v1417
        %vm1419 = vweird.f32 %v1413
        %vm1420 = vweird.f32 %v1414
        %vm1421 = vmor %vm1419, %vm1420
        %v1422 = vsel %vm1421, %v1414, %v1418
        %v1423 = vand.u32 2147483647, %v1413
        %vm1424 = vcmp.eq.f32.partialorder %v1423, 8.507059e+37
        %v1425 = vand.u32 %v1413, 2147483648
        %v1426 = vor.u32 1.1754944e-38, %v1425
        %v1427 = vsel %vm1424, %v1426, %v1422
        %v1428 = vmul.f32 1.0, %v1427
        %v1429 = vtanh.pop %v1388
        %v1430 = vxor.u32 %v1389, 2147483648
        %v1431 = vmul.f32 %v1430, 1.442695
        %v1432 = vpow.pop %v1431
        %v1433 = vadd.f32 %v1432, 1.0
        %v1434 = vrcp.pop %v1433
        %v1435 = vmul.f32 %v1433, %v1434
        %v1436 = vsub.f32 1.0, %v1435
        %v1437 = vmul.f32 %v1434, %v1436
        %v1438 = vadd.f32 %v1434, %v1437
        %vm1439 = vweird.f32 %v1433
        %vm1440 = vweird.f32 %v1434
        %vm1441 = vmor %vm1439, %vm1440
        %v1442 = vsel %vm1441, %v1434, %v1438
        %v1443 = vand.u32 2147483647, %v1433
        %vm1444 = vcmp.eq.f32.partialorder %v1443, 8.507059e+37
        %v1445 = vand.u32 %v1433, 2147483648
        %v1446 = vor.u32 1.1754944e-38, %v1445
        %v1447 = vsel %vm1444, %v1446, %v1442
        %v1448 = vmul.f32 1.0, %v1447
        %v1449 = vmul.f32 %v1428, %v1390
        %v1450 = vmul.f32 %v1409, %v1429
        %v1451 = vadd.f32 %v1449, %v1450
        %v1452 = vtanh.pop %v1451
        %v1453 = vmul.f32 %v1448, %v1452
        %v1454 = vsel %vm1299, %v1453, %v1305
        %1455 = vst [vmem:[#allocation2] sm:$0xff] %v1454
        %v1456 = vld [vmem:[#allocation3] sm:$0xff]
        %v1457 = vsel %vm1299, %v1451, %v1456
        %1458 = vst [vmem:[#allocation3] sm:$0xff] %v1457
        %v1459 = vld [vmem:[#allocation2] sm:$0xff]
        %v1460 = vld [vmem:[#allocation2 + $0x8] sm:$0xff]
        %1461 = vmatpush.msra.mxu0 %v415
        %1462 = vmatpush.msra.mxu0 %v411
        %1463 = vmatpush.msra.mxu0 %v407
        %1464 = vmatpush.msra.mxu0 %v403
        %1465 = vmatpush.msra.mxu0 %v399
        %1466 = vmatpush.msra.mxu0 %v395
        %1467 = vmatpush.msra.mxu0 %v391
        %1468 = vmatpush.msra.mxu0 %v387
        %1469 = vmatpush.msra.mxu0 %v383
        %1470 = vmatpush.msra.mxu0 %v379
        %1471 = vmatpush.msra.mxu0 %v375
        %1472 = vmatpush.msra.mxu0 %v371
        %1473 = vmatpush.msra.mxu0 %v367
        %1474 = vmatpush.msra.mxu0 %v363
        %1475 = vmatpush.msra.mxu0 %v359
        %1476 = vmatpush.msra.mxu0 %v355
        %1477 = vmatmul.f32.gmra.mxu0 %v1459
        %v1478 = vpop.f32.mrf.mxu0
        %v1479 = vadd.f32 %v485, %v1478
        %1480 = vdwg.mxu0
        %1481 = vmatpush.msra.mxu0 %v479
        %1482 = vmatpush.msra.mxu0 %v475
        %1483 = vmatpush.msra.mxu0 %v471
        %1484 = vmatpush.msra.mxu0 %v467
        %1485 = vmatpush.msra.mxu0 %v463
        %1486 = vmatpush.msra.mxu0 %v459
        %1487 = vmatpush.msra.mxu0 %v455
        %1488 = vmatpush.msra.mxu0 %v451
        %1489 = vmatpush.msra.mxu0 %v447
        %1490 = vmatpush.msra.mxu0 %v443
        %1491 = vmatpush.msra.mxu0 %v439
        %1492 = vmatpush.msra.mxu0 %v435
        %1493 = vmatpush.msra.mxu0 %v431
        %1494 = vmatpush.msra.mxu0 %v427
        %1495 = vmatpush.msra.mxu0 %v423
        %1496 = vmatpush.msra.mxu0 %v419
        %1497 = vmatmul.f32.gmra.mxu0 %v1460
        %v1498 = vpop.f32.mrf.mxu0
        %v1499 = vadd.f32 %v1479, %v1498
        %1500 = vdwg.mxu0
        %1501 = vmatpush.msra.mxu0 %v416
        %1502 = vmatpush.msra.mxu0 %v412
        %1503 = vmatpush.msra.mxu0 %v408
        %1504 = vmatpush.msra.mxu0 %v404
        %1505 = vmatpush.msra.mxu0 %v400
        %1506 = vmatpush.msra.mxu0 %v396
        %1507 = vmatpush.msra.mxu0 %v392
        %1508 = vmatpush.msra.mxu0 %v388
        %1509 = vmatpush.msra.mxu0 %v384
        %1510 = vmatpush.msra.mxu0 %v380
        %1511 = vmatpush.msra.mxu0 %v376
        %1512 = vmatpush.msra.mxu0 %v372
        %1513 = vmatpush.msra.mxu0 %v368
        %1514 = vmatpush.msra.mxu0 %v364
        %1515 = vmatpush.msra.mxu0 %v360
        %1516 = vmatpush.msra.mxu0 %v356
        %1517 = vmatmul.f32.gmra.mxu0 %v1459
        %v1518 = vpop.f32.mrf.mxu0
        %v1519 = vadd.f32 %v486, %v1518
        %1520 = vdwg.mxu0
        %1521 = vmatpush.msra.mxu0 %v480
        %1522 = vmatpush.msra.mxu0 %v476
        %1523 = vmatpush.msra.mxu0 %v472
        %1524 = vmatpush.msra.mxu0 %v468
        %1525 = vmatpush.msra.mxu0 %v464
        %1526 = vmatpush.msra.mxu0 %v460
        %1527 = vmatpush.msra.mxu0 %v456
        %1528 = vmatpush.msra.mxu0 %v452
        %1529 = vmatpush.msra.mxu0 %v448
        %1530 = vmatpush.msra.mxu0 %v444
        %1531 = vmatpush.msra.mxu0 %v440
        %1532 = vmatpush.msra.mxu0 %v436
        %1533 = vmatpush.msra.mxu0 %v432
        %1534 = vmatpush.msra.mxu0 %v428
        %1535 = vmatpush.msra.mxu0 %v424
        %1536 = vmatpush.msra.mxu0 %v420
        %1537 = vmatmul.f32.gmra.mxu0 %v1460
        %v1538 = vpop.f32.mrf.mxu0
        %v1539 = vadd.f32 %v1519, %v1538
        %1540 = vdwg.mxu0
        %1541 = vmatpush.msra.mxu0 %v417
        %1542 = vmatpush.msra.mxu0 %v413
        %1543 = vmatpush.msra.mxu0 %v409
        %1544 = vmatpush.msra.mxu0 %v405
        %1545 = vmatpush.msra.mxu0 %v401
        %1546 = vmatpush.msra.mxu0 %v397
        %1547 = vmatpush.msra.mxu0 %v393
        %1548 = vmatpush.msra.mxu0 %v389
        %1549 = vmatpush.msra.mxu0 %v385
        %1550 = vmatpush.msra.mxu0 %v381
        %1551 = vmatpush.msra.mxu0 %v377
        %1552 = vmatpush.msra.mxu0 %v373
        %1553 = vmatpush.msra.mxu0 %v369
        %1554 = vmatpush.msra.mxu0 %v365
        %1555 = vmatpush.msra.mxu0 %v361
        %1556 = vmatpush.msra.mxu0 %v357
        %1557 = vmatmul.f32.gmra.mxu0 %v1459
        %v1558 = vpop.f32.mrf.mxu0
        %v1559 = vadd.f32 %v487, %v1558
        %1560 = vdwg.mxu0
        %1561 = vmatpush.msra.mxu0 %v481
        %1562 = vmatpush.msra.mxu0 %v477
        %1563 = vmatpush.msra.mxu0 %v473
        %1564 = vmatpush.msra.mxu0 %v469
        %1565 = vmatpush.msra.mxu0 %v465
        %1566 = vmatpush.msra.mxu0 %v461
        %1567 = vmatpush.msra.mxu0 %v457
        %1568 = vmatpush.msra.mxu0 %v453
        %1569 = vmatpush.msra.mxu0 %v449
        %1570 = vmatpush.msra.mxu0 %v445
        %1571 = vmatpush.msra.mxu0 %v441
        %1572 = vmatpush.msra.mxu0 %v437
        %1573 = vmatpush.msra.mxu0 %v433
        %1574 = vmatpush.msra.mxu0 %v429
        %1575 = vmatpush.msra.mxu0 %v425
        %1576 = vmatpush.msra.mxu0 %v421
        %1577 = vmatmul.f32.gmra.mxu0 %v1460
        %v1578 = vpop.f32.mrf.mxu0
        %v1579 = vadd.f32 %v1559, %v1578
        %1580 = vdwg.mxu0
        %1581 = vmatpush.msra.mxu0 %v418
        %1582 = vmatpush.msra.mxu0 %v414
        %1583 = vmatpush.msra.mxu0 %v410
        %1584 = vmatpush.msra.mxu0 %v406
        %1585 = vmatpush.msra.mxu0 %v402
        %1586 = vmatpush.msra.mxu0 %v398
        %1587 = vmatpush.msra.mxu0 %v394
        %1588 = vmatpush.msra.mxu0 %v390
        %1589 = vmatpush.msra.mxu0 %v386
        %1590 = vmatpush.msra.mxu0 %v382
        %1591 = vmatpush.msra.mxu0 %v378
        %1592 = vmatpush.msra.mxu0 %v374
        %1593 = vmatpush.msra.mxu0 %v370
        %1594 = vmatpush.msra.mxu0 %v366
        %1595 = vmatpush.msra.mxu0 %v362
        %1596 = vmatpush.msra.mxu0 %v358
        %1597 = vmatmul.f32.gmra.mxu0 %v1459
        %v1598 = vpop.f32.mrf.mxu0
        %v1599 = vadd.f32 %v488, %v1598
        %1600 = vdwg.mxu0
        %1601 = vmatpush.msra.mxu0 %v482
        %1602 = vmatpush.msra.mxu0 %v478
        %1603 = vmatpush.msra.mxu0 %v474
        %1604 = vmatpush.msra.mxu0 %v470
        %1605 = vmatpush.msra.mxu0 %v466
        %1606 = vmatpush.msra.mxu0 %v462
        %1607 = vmatpush.msra.mxu0 %v458
        %1608 = vmatpush.msra.mxu0 %v454
        %1609 = vmatpush.msra.mxu0 %v450
        %1610 = vmatpush.msra.mxu0 %v446
        %1611 = vmatpush.msra.mxu0 %v442
        %1612 = vmatpush.msra.mxu0 %v438
        %1613 = vmatpush.msra.mxu0 %v434
        %1614 = vmatpush.msra.mxu0 %v430
        %1615 = vmatpush.msra.mxu0 %v426
        %1616 = vmatpush.msra.mxu0 %v422
        %1617 = vmatmul.f32.gmra.mxu0 %v1460
        %v1618 = vpop.f32.mrf.mxu0
        %v1619 = vadd.f32 %v1599, %v1618
        %1620 = vdwg.mxu0
        %v1621 = vld [vmem:[#allocation4] sm:$0xff]
        %v1622 = vxor.u32 %v1499, 2147483648
        %v1623 = vmul.f32 %v1622, 1.442695
        %v1624 = vpow.pop %v1623
        %v1625 = vadd.f32 %v1624, 1.0
        %v1626 = vrcp.pop %v1625
        %v1627 = vmul.f32 %v1625, %v1626
        %v1628 = vsub.f32 1.0, %v1627
        %v1629 = vmul.f32 %v1626, %v1628
        %v1630 = vadd.f32 %v1626, %v1629
        %vm1631 = vweird.f32 %v1625
        %vm1632 = vweird.f32 %v1626
        %vm1633 = vmor %vm1631, %vm1632
        %v1634 = vsel %vm1633, %v1626, %v1630
        %v1635 = vand.u32 2147483647, %v1625
        %vm1636 = vcmp.eq.f32.partialorder %v1635, 8.507059e+37
        %v1637 = vand.u32 %v1625, 2147483648
        %v1638 = vor.u32 1.1754944e-38, %v1637
        %v1639 = vsel %vm1636, %v1638, %v1634
        %v1640 = vmul.f32 1.0, %v1639
        %v1641 = vxor.u32 %v1539, 2147483648
        %v1642 = vmul.f32 %v1641, 1.442695
        %v1643 = vpow.pop %v1642
        %v1644 = vadd.f32 %v1643, 1.0
        %v1645 = vrcp.pop %v1644
        %v1646 = vmul.f32 %v1644, %v1645
        %v1647 = vsub.f32 1.0, %v1646
        %v1648 = vmul.f32 %v1645, %v1647
        %v1649 = vadd.f32 %v1645, %v1648
        %vm1650 = vweird.f32 %v1644
        %vm1651 = vweird.f32 %v1645
        %vm1652 = vmor %vm1650, %vm1651
        %v1653 = vsel %vm1652, %v1645, %v1649
        %v1654 = vand.u32 2147483647, %v1644
        %vm1655 = vcmp.eq.f32.partialorder %v1654, 8.507059e+37
        %v1656 = vand.u32 %v1644, 2147483648
        %v1657 = vor.u32 1.1754944e-38, %v1656
        %v1658 = vsel %vm1655, %v1657, %v1653
        %v1659 = vmul.f32 1.0, %v1658
        %v1660 = vtanh.pop %v1579
        %v1661 = vxor.u32 %v1619, 2147483648
        %v1662 = vmul.f32 %v1661, 1.442695
        %v1663 = vpow.pop %v1662
        %v1664 = vadd.f32 %v1663, 1.0
        %v1665 = vrcp.pop %v1664
        %v1666 = vmul.f32 %v1664, %v1665
        %v1667 = vsub.f32 1.0, %v1666
        %v1668 = vmul.f32 %v1665, %v1667
        %v1669 = vadd.f32 %v1665, %v1668
        %vm1670 = vweird.f32 %v1664
        %vm1671 = vweird.f32 %v1665
        %vm1672 = vmor %vm1670, %vm1671
        %v1673 = vsel %vm1672, %v1665, %v1669
        %v1674 = vand.u32 2147483647, %v1664
        %vm1675 = vcmp.eq.f32.partialorder %v1674, 8.507059e+37
        %v1676 = vand.u32 %v1664, 2147483648
        %v1677 = vor.u32 1.1754944e-38, %v1676
        %v1678 = vsel %vm1675, %v1677, %v1673
        %v1679 = vmul.f32 1.0, %v1678
        %v1680 = vmul.f32 %v1659, %v1621
        %v1681 = vmul.f32 %v1640, %v1660
        %v1682 = vadd.f32 %v1680, %v1681
        %v1683 = vtanh.pop %v1682
        %v1684 = vmul.f32 %v1679, %v1683
        %v1685 = vsel %vm1299, %v1684, %v1460
        %1686 = vst [vmem:[#allocation2 + $0x8] sm:$0xff] %v1685
        %v1687 = vld [vmem:[#allocation4] sm:$0xff]
        %v1688 = vsel %vm1299, %v1682, %v1687
        %1689 = vst [vmem:[#allocation4] sm:$0xff] %v1688
        %v1690 = vsel %vm1299, %v1684, 0.0
        %s1691 = scalar_lea.vmem %s278, 16 [#allocation11]
        %1692 = vst [vmem:[%s1691] sm:$0xff] %v1690
        %s1693 = sadd.s32 %s289, 3
        %v1694 = vstv %s1693
        %vm1695 = vcmp.gt.s32.totalorder %v290, %v1694
        %v1696 = vsel %vm1695, 1, 0
        %1697 = vset.pattern.permute.xlu0 0
        %1698 = vperm.xlu0 %1697, %v1696
        %v1699 = vpop.permute.xlu0 %1698
        %vm1700 = vcmp.eq.s32.totalorder %v1699, 1
        %s1701 = scalar_lea.vmem %s241, 96 [#allocation5]
        %v1702 = vld [vmem:[%s1701] sm:$0xff]
        %v1703 = vld [vmem:[%s1701 + $0x8] sm:$0xff]
        %v1704 = vld [vmem:[%s1701 + $0x10] sm:$0xff]
        %v1705 = vld [vmem:[%s1701 + $0x18] sm:$0xff]
        %v1706 = vld [vmem:[#allocation2] sm:$0xff]
        %1707 = vmatpush.msra.mxu0 %v351
        %1708 = vmatpush.msra.mxu0 %v347
        %1709 = vmatpush.msra.mxu0 %v343
        %1710 = vmatpush.msra.mxu0 %v339
        %1711 = vmatpush.msra.mxu0 %v335
        %1712 = vmatpush.msra.mxu0 %v331
        %1713 = vmatpush.msra.mxu0 %v327
        %1714 = vmatpush.msra.mxu0 %v323
        %1715 = vmatpush.msra.mxu0 %v319
        %1716 = vmatpush.msra.mxu0 %v315
        %1717 = vmatpush.msra.mxu0 %v311
        %1718 = vmatpush.msra.mxu0 %v307
        %1719 = vmatpush.msra.mxu0 %v303
        %1720 = vmatpush.msra.mxu0 %v299
        %1721 = vmatpush.msra.mxu0 %v295
        %1722 = vmatpush.msra.mxu0 %v291
        %1723 = vmatmul.f32.gmra.mxu0 %v1706
        %v1724 = vpop.f32.mrf.mxu0
        %v1725 = vadd.f32 0.0, %v1724
        %1726 = vdwg.mxu0
        %1727 = vmatpush.msra.mxu0 %v352
        %1728 = vmatpush.msra.mxu0 %v348
        %1729 = vmatpush.msra.mxu0 %v344
        %1730 = vmatpush.msra.mxu0 %v340
        %1731 = vmatpush.msra.mxu0 %v336
        %1732 = vmatpush.msra.mxu0 %v332
        %1733 = vmatpush.msra.mxu0 %v328
        %1734 = vmatpush.msra.mxu0 %v324
        %1735 = vmatpush.msra.mxu0 %v320
        %1736 = vmatpush.msra.mxu0 %v316
        %1737 = vmatpush.msra.mxu0 %v312
        %1738 = vmatpush.msra.mxu0 %v308
        %1739 = vmatpush.msra.mxu0 %v304
        %1740 = vmatpush.msra.mxu0 %v300
        %1741 = vmatpush.msra.mxu0 %v296
        %1742 = vmatpush.msra.mxu0 %v292
        %1743 = vmatmul.f32.gmra.mxu0 %v1706
        %v1744 = vpop.f32.mrf.mxu0
        %v1745 = vadd.f32 0.0, %v1744
        %1746 = vdwg.mxu0
        %1747 = vmatpush.msra.mxu0 %v353
        %1748 = vmatpush.msra.mxu0 %v349
        %1749 = vmatpush.msra.mxu0 %v345
        %1750 = vmatpush.msra.mxu0 %v341
        %1751 = vmatpush.msra.mxu0 %v337
        %1752 = vmatpush.msra.mxu0 %v333
        %1753 = vmatpush.msra.mxu0 %v329
        %1754 = vmatpush.msra.mxu0 %v325
        %1755 = vmatpush.msra.mxu0 %v321
        %1756 = vmatpush.msra.mxu0 %v317
        %1757 = vmatpush.msra.mxu0 %v313
        %1758 = vmatpush.msra.mxu0 %v309
        %1759 = vmatpush.msra.mxu0 %v305
        %1760 = vmatpush.msra.mxu0 %v301
        %1761 = vmatpush.msra.mxu0 %v297
        %1762 = vmatpush.msra.mxu0 %v293
        %1763 = vmatmul.f32.gmra.mxu0 %v1706
        %v1764 = vpop.f32.mrf.mxu0
        %v1765 = vadd.f32 0.0, %v1764
        %1766 = vdwg.mxu0
        %1767 = vmatpush.msra.mxu0 %v354
        %1768 = vmatpush.msra.mxu0 %v350
        %1769 = vmatpush.msra.mxu0 %v346
        %1770 = vmatpush.msra.mxu0 %v342
        %1771 = vmatpush.msra.mxu0 %v338
        %1772 = vmatpush.msra.mxu0 %v334
        %1773 = vmatpush.msra.mxu0 %v330
        %1774 = vmatpush.msra.mxu0 %v326
        %1775 = vmatpush.msra.mxu0 %v322
        %1776 = vmatpush.msra.mxu0 %v318
        %1777 = vmatpush.msra.mxu0 %v314
        %1778 = vmatpush.msra.mxu0 %v310
        %1779 = vmatpush.msra.mxu0 %v306
        %1780 = vmatpush.msra.mxu0 %v302
        %1781 = vmatpush.msra.mxu0 %v298
        %1782 = vmatpush.msra.mxu0 %v294
        %1783 = vmatmul.f32.gmra.mxu0 %v1706
        %v1784 = vpop.f32.mrf.mxu0
        %v1785 = vadd.f32 0.0, %v1784
        %1786 = vdwg.mxu0
        %v1787 = vadd.f32 %v1702, %v1725
        %v1788 = vadd.f32 %v1703, %v1745
        %v1789 = vadd.f32 %v1704, %v1765
        %v1790 = vadd.f32 %v1705, %v1785
        %v1791 = vld [vmem:[#allocation3] sm:$0xff]
        %v1792 = vxor.u32 %v1787, 2147483648
        %v1793 = vmul.f32 %v1792, 1.442695
        %v1794 = vpow.pop %v1793
        %v1795 = vadd.f32 %v1794, 1.0
        %v1796 = vrcp.pop %v1795
        %v1797 = vmul.f32 %v1795, %v1796
        %v1798 = vsub.f32 1.0, %v1797
        %v1799 = vmul.f32 %v1796, %v1798
        %v1800 = vadd.f32 %v1796, %v1799
        %vm1801 = vweird.f32 %v1795
        %vm1802 = vweird.f32 %v1796
        %vm1803 = vmor %vm1801, %vm1802
        %v1804 = vsel %vm1803, %v1796, %v1800
        %v1805 = vand.u32 2147483647, %v1795
        %vm1806 = vcmp.eq.f32.partialorder %v1805, 8.507059e+37
        %v1807 = vand.u32 %v1795, 2147483648
        %v1808 = vor.u32 1.1754944e-38, %v1807
        %v1809 = vsel %vm1806, %v1808, %v1804
        %v1810 = vmul.f32 1.0, %v1809
        %v1811 = vxor.u32 %v1788, 2147483648
        %v1812 = vmul.f32 %v1811, 1.442695
        %v1813 = vpow.pop %v1812
        %v1814 = vadd.f32 %v1813, 1.0
        %v1815 = vrcp.pop %v1814
        %v1816 = vmul.f32 %v1814, %v1815
        %v1817 = vsub.f32 1.0, %v1816
        %v1818 = vmul.f32 %v1815, %v1817
        %v1819 = vadd.f32 %v1815, %v1818
        %vm1820 = vweird.f32 %v1814
        %vm1821 = vweird.f32 %v1815
        %vm1822 = vmor %vm1820, %vm1821
        %v1823 = vsel %vm1822, %v1815, %v1819
        %v1824 = vand.u32 2147483647, %v1814
        %vm1825 = vcmp.eq.f32.partialorder %v1824, 8.507059e+37
        %v1826 = vand.u32 %v1814, 2147483648
        %v1827 = vor.u32 1.1754944e-38, %v1826
        %v1828 = vsel %vm1825, %v1827, %v1823
        %v1829 = vmul.f32 1.0, %v1828
        %v1830 = vtanh.pop %v1789
        %v1831 = vxor.u32 %v1790, 2147483648
        %v1832 = vmul.f32 %v1831, 1.442695
        %v1833 = vpow.pop %v1832
        %v1834 = vadd.f32 %v1833, 1.0
        %v1835 = vrcp.pop %v1834
        %v1836 = vmul.f32 %v1834, %v1835
        %v1837 = vsub.f32 1.0, %v1836
        %v1838 = vmul.f32 %v1835, %v1837
        %v1839 = vadd.f32 %v1835, %v1838
        %vm1840 = vweird.f32 %v1834
        %vm1841 = vweird.f32 %v1835
        %vm1842 = vmor %vm1840, %vm1841
        %v1843 = vsel %vm1842, %v1835, %v1839
        %v1844 = vand.u32 2147483647, %v1834
        %vm1845 = vcmp.eq.f32.partialorder %v1844, 8.507059e+37
        %v1846 = vand.u32 %v1834, 2147483648
        %v1847 = vor.u32 1.1754944e-38, %v1846
        %v1848 = vsel %vm1845, %v1847, %v1843
        %v1849 = vmul.f32 1.0, %v1848
        %v1850 = vmul.f32 %v1829, %v1791
        %v1851 = vmul.f32 %v1810, %v1830
        %v1852 = vadd.f32 %v1850, %v1851
        %v1853 = vtanh.pop %v1852
        %v1854 = vmul.f32 %v1849, %v1853
        %v1855 = vsel %vm1700, %v1854, %v1706
        %1856 = vst [vmem:[#allocation2] sm:$0xff] %v1855
        %v1857 = vld [vmem:[#allocation3] sm:$0xff]
        %v1858 = vsel %vm1700, %v1852, %v1857
        %1859 = vst [vmem:[#allocation3] sm:$0xff] %v1858
        %v1860 = vld [vmem:[#allocation2] sm:$0xff]
        %v1861 = vld [vmem:[#allocation2 + $0x8] sm:$0xff]
        %1862 = vmatpush.msra.mxu0 %v415
        %1863 = vmatpush.msra.mxu0 %v411
        %1864 = vmatpush.msra.mxu0 %v407
        %1865 = vmatpush.msra.mxu0 %v403
        %1866 = vmatpush.msra.mxu0 %v399
        %1867 = vmatpush.msra.mxu0 %v395
        %1868 = vmatpush.msra.mxu0 %v391
        %1869 = vmatpush.msra.mxu0 %v387
        %1870 = vmatpush.msra.mxu0 %v383
        %1871 = vmatpush.msra.mxu0 %v379
        %1872 = vmatpush.msra.mxu0 %v375
        %1873 = vmatpush.msra.mxu0 %v371
        %1874 = vmatpush.msra.mxu0 %v367
        %1875 = vmatpush.msra.mxu0 %v363
        %1876 = vmatpush.msra.mxu0 %v359
        %1877 = vmatpush.msra.mxu0 %v355
        %1878 = vmatmul.f32.gmra.mxu0 %v1860
        %v1879 = vpop.f32.mrf.mxu0
        %v1880 = vadd.f32 %v485, %v1879
        %1881 = vdwg.mxu0
        %1882 = vmatpush.msra.mxu0 %v479
        %1883 = vmatpush.msra.mxu0 %v475
        %1884 = vmatpush.msra.mxu0 %v471
        %1885 = vmatpush.msra.mxu0 %v467
        %1886 = vmatpush.msra.mxu0 %v463
        %1887 = vmatpush.msra.mxu0 %v459
        %1888 = vmatpush.msra.mxu0 %v455
        %1889 = vmatpush.msra.mxu0 %v451
        %1890 = vmatpush.msra.mxu0 %v447
        %1891 = vmatpush.msra.mxu0 %v443
        %1892 = vmatpush.msra.mxu0 %v439
        %1893 = vmatpush.msra.mxu0 %v435
        %1894 = vmatpush.msra.mxu0 %v431
        %1895 = vmatpush.msra.mxu0 %v427
        %1896 = vmatpush.msra.mxu0 %v423
        %1897 = vmatpush.msra.mxu0 %v419
        %1898 = vmatmul.f32.gmra.mxu0 %v1861
        %v1899 = vpop.f32.mrf.mxu0
        %v1900 = vadd.f32 %v1880, %v1899
        %1901 = vdwg.mxu0
        %1902 = vmatpush.msra.mxu0 %v416
        %1903 = vmatpush.msra.mxu0 %v412
        %1904 = vmatpush.msra.mxu0 %v408
        %1905 = vmatpush.msra.mxu0 %v404
        %1906 = vmatpush.msra.mxu0 %v400
        %1907 = vmatpush.msra.mxu0 %v396
        %1908 = vmatpush.msra.mxu0 %v392
        %1909 = vmatpush.msra.mxu0 %v388
        %1910 = vmatpush.msra.mxu0 %v384
        %1911 = vmatpush.msra.mxu0 %v380
        %1912 = vmatpush.msra.mxu0 %v376
        %1913 = vmatpush.msra.mxu0 %v372
        %1914 = vmatpush.msra.mxu0 %v368
        %1915 = vmatpush.msra.mxu0 %v364
        %1916 = vmatpush.msra.mxu0 %v360
        %1917 = vmatpush.msra.mxu0 %v356
        %1918 = vmatmul.f32.gmra.mxu0 %v1860
        %v1919 = vpop.f32.mrf.mxu0
        %v1920 = vadd.f32 %v486, %v1919
        %1921 = vdwg.mxu0
        %1922 = vmatpush.msra.mxu0 %v480
        %1923 = vmatpush.msra.mxu0 %v476
        %1924 = vmatpush.msra.mxu0 %v472
        %1925 = vmatpush.msra.mxu0 %v468
        %1926 = vmatpush.msra.mxu0 %v464
        %1927 = vmatpush.msra.mxu0 %v460
        %1928 = vmatpush.msra.mxu0 %v456
        %1929 = vmatpush.msra.mxu0 %v452
        %1930 = vmatpush.msra.mxu0 %v448
        %1931 = vmatpush.msra.mxu0 %v444
        %1932 = vmatpush.msra.mxu0 %v440
        %1933 = vmatpush.msra.mxu0 %v436
        %1934 = vmatpush.msra.mxu0 %v432
        %1935 = vmatpush.msra.mxu0 %v428
        %1936 = vmatpush.msra.mxu0 %v424
        %1937 = vmatpush.msra.mxu0 %v420
        %1938 = vmatmul.f32.gmra.mxu0 %v1861
        %v1939 = vpop.f32.mrf.mxu0
        %v1940 = vadd.f32 %v1920, %v1939
        %1941 = vdwg.mxu0
        %1942 = vmatpush.msra.mxu0 %v417
        %1943 = vmatpush.msra.mxu0 %v413
        %1944 = vmatpush.msra.mxu0 %v409
        %1945 = vmatpush.msra.mxu0 %v405
        %1946 = vmatpush.msra.mxu0 %v401
        %1947 = vmatpush.msra.mxu0 %v397
        %1948 = vmatpush.msra.mxu0 %v393
        %1949 = vmatpush.msra.mxu0 %v389
        %1950 = vmatpush.msra.mxu0 %v385
        %1951 = vmatpush.msra.mxu0 %v381
        %1952 = vmatpush.msra.mxu0 %v377
        %1953 = vmatpush.msra.mxu0 %v373
        %1954 = vmatpush.msra.mxu0 %v369
        %1955 = vmatpush.msra.mxu0 %v365
        %1956 = vmatpush.msra.mxu0 %v361
        %1957 = vmatpush.msra.mxu0 %v357
        %1958 = vmatmul.f32.gmra.mxu0 %v1860
        %v1959 = vpop.f32.mrf.mxu0
        %v1960 = vadd.f32 %v487, %v1959
        %1961 = vdwg.mxu0
        %1962 = vmatpush.msra.mxu0 %v481
        %1963 = vmatpush.msra.mxu0 %v477
        %1964 = vmatpush.msra.mxu0 %v473
        %1965 = vmatpush.msra.mxu0 %v469
        %1966 = vmatpush.msra.mxu0 %v465
        %1967 = vmatpush.msra.mxu0 %v461
        %1968 = vmatpush.msra.mxu0 %v457
        %1969 = vmatpush.msra.mxu0 %v453
        %1970 = vmatpush.msra.mxu0 %v449
        %1971 = vmatpush.msra.mxu0 %v445
        %1972 = vmatpush.msra.mxu0 %v441
        %1973 = vmatpush.msra.mxu0 %v437
        %1974 = vmatpush.msra.mxu0 %v433
        %1975 = vmatpush.msra.mxu0 %v429
        %1976 = vmatpush.msra.mxu0 %v425
        %1977 = vmatpush.msra.mxu0 %v421
        %1978 = vmatmul.f32.gmra.mxu0 %v1861
        %v1979 = vpop.f32.mrf.mxu0
        %v1980 = vadd.f32 %v1960, %v1979
        %1981 = vdwg.mxu0
        %1982 = vmatpush.msra.mxu0 %v418
        %1983 = vmatpush.msra.mxu0 %v414
        %1984 = vmatpush.msra.mxu0 %v410
        %1985 = vmatpush.msra.mxu0 %v406
        %1986 = vmatpush.msra.mxu0 %v402
        %1987 = vmatpush.msra.mxu0 %v398
        %1988 = vmatpush.msra.mxu0 %v394
        %1989 = vmatpush.msra.mxu0 %v390
        %1990 = vmatpush.msra.mxu0 %v386
        %1991 = vmatpush.msra.mxu0 %v382
        %1992 = vmatpush.msra.mxu0 %v378
        %1993 = vmatpush.msra.mxu0 %v374
        %1994 = vmatpush.msra.mxu0 %v370
        %1995 = vmatpush.msra.mxu0 %v366
        %1996 = vmatpush.msra.mxu0 %v362
        %1997 = vmatpush.msra.mxu0 %v358
        %1998 = vmatmul.f32.gmra.mxu0 %v1860
        %v1999 = vpop.f32.mrf.mxu0
        %v2000 = vadd.f32 %v488, %v1999
        %2001 = vdwg.mxu0
        %2002 = vmatpush.msra.mxu0 %v482
        %2003 = vmatpush.msra.mxu0 %v478
        %2004 = vmatpush.msra.mxu0 %v474
        %2005 = vmatpush.msra.mxu0 %v470
        %2006 = vmatpush.msra.mxu0 %v466
        %2007 = vmatpush.msra.mxu0 %v462
        %2008 = vmatpush.msra.mxu0 %v458
        %2009 = vmatpush.msra.mxu0 %v454
        %2010 = vmatpush.msra.mxu0 %v450
        %2011 = vmatpush.msra.mxu0 %v446
        %2012 = vmatpush.msra.mxu0 %v442
        %2013 = vmatpush.msra.mxu0 %v438
        %2014 = vmatpush.msra.mxu0 %v434
        %2015 = vmatpush.msra.mxu0 %v430
        %2016 = vmatpush.msra.mxu0 %v426
        %2017 = vmatpush.msra.mxu0 %v422
        %2018 = vmatmul.f32.gmra.mxu0 %v1861
        %v2019 = vpop.f32.mrf.mxu0
        %v2020 = vadd.f32 %v2000, %v2019
        %2021 = vdwg.mxu0
        %v2022 = vld [vmem:[#allocation4] sm:$0xff]
        %v2023 = vxor.u32 %v1900, 2147483648
        %v2024 = vmul.f32 %v2023, 1.442695
        %v2025 = vpow.pop %v2024
        %v2026 = vadd.f32 %v2025, 1.0
        %v2027 = vrcp.pop %v2026
        %v2028 = vmul.f32 %v2026, %v2027
        %v2029 = vsub.f32 1.0, %v2028
        %v2030 = vmul.f32 %v2027, %v2029
        %v2031 = vadd.f32 %v2027, %v2030
        %vm2032 = vweird.f32 %v2026
        %vm2033 = vweird.f32 %v2027
        %vm2034 = vmor %vm2032, %vm2033
        %v2035 = vsel %vm2034, %v2027, %v2031
        %v2036 = vand.u32 2147483647, %v2026
        %vm2037 = vcmp.eq.f32.partialorder %v2036, 8.507059e+37
        %v2038 = vand.u32 %v2026, 2147483648
        %v2039 = vor.u32 1.1754944e-38, %v2038
        %v2040 = vsel %vm2037, %v2039, %v2035
        %v2041 = vmul.f32 1.0, %v2040
        %v2042 = vxor.u32 %v1940, 2147483648
        %v2043 = vmul.f32 %v2042, 1.442695
        %v2044 = vpow.pop %v2043
        %v2045 = vadd.f32 %v2044, 1.0
        %v2046 = vrcp.pop %v2045
        %v2047 = vmul.f32 %v2045, %v2046
        %v2048 = vsub.f32 1.0, %v2047
        %v2049 = vmul.f32 %v2046, %v2048
        %v2050 = vadd.f32 %v2046, %v2049
        %vm2051 = vweird.f32 %v2045
        %vm2052 = vweird.f32 %v2046
        %vm2053 = vmor %vm2051, %vm2052
        %v2054 = vsel %vm2053, %v2046, %v2050
        %v2055 = vand.u32 2147483647, %v2045
        %vm2056 = vcmp.eq.f32.partialorder %v2055, 8.507059e+37
        %v2057 = vand.u32 %v2045, 2147483648
        %v2058 = vor.u32 1.1754944e-38, %v2057
        %v2059 = vsel %vm2056, %v2058, %v2054
        %v2060 = vmul.f32 1.0, %v2059
        %v2061 = vtanh.pop %v1980
        %v2062 = vxor.u32 %v2020, 2147483648
        %v2063 = vmul.f32 %v2062, 1.442695
        %v2064 = vpow.pop %v2063
        %v2065 = vadd.f32 %v2064, 1.0
        %v2066 = vrcp.pop %v2065
        %v2067 = vmul.f32 %v2065, %v2066
        %v2068 = vsub.f32 1.0, %v2067
        %v2069 = vmul.f32 %v2066, %v2068
        %v2070 = vadd.f32 %v2066, %v2069
        %vm2071 = vweird.f32 %v2065
        %vm2072 = vweird.f32 %v2066
        %vm2073 = vmor %vm2071, %vm2072
        %v2074 = vsel %vm2073, %v2066, %v2070
        %v2075 = vand.u32 2147483647, %v2065
        %vm2076 = vcmp.eq.f32.partialorder %v2075, 8.507059e+37
        %v2077 = vand.u32 %v2065, 2147483648
        %v2078 = vor.u32 1.1754944e-38, %v2077
        %v2079 = vsel %vm2076, %v2078, %v2074
        %v2080 = vmul.f32 1.0, %v2079
        %v2081 = vmul.f32 %v2060, %v2022
        %v2082 = vmul.f32 %v2041, %v2061
        %v2083 = vadd.f32 %v2081, %v2082
        %v2084 = vtanh.pop %v2083
        %v2085 = vmul.f32 %v2080, %v2084
        %v2086 = vsel %vm1700, %v2085, %v1861
        %2087 = vst [vmem:[#allocation2 + $0x8] sm:$0xff] %v2086
        %v2088 = vld [vmem:[#allocation4] sm:$0xff]
        %v2089 = vsel %vm1700, %v2083, %v2088
        %2090 = vst [vmem:[#allocation4] sm:$0xff] %v2089
        %v2091 = vsel %vm1700, %v2085, 0.0
        %s2092 = scalar_lea.vmem %s278, 24 [#allocation11]
        %2093 = vst [vmem:[%s2092] sm:$0xff] %v2091
        %s2094 = sand.u32 %s141, 1
        %s2095 = scalar_lea.sflag [#allocation7], %s2094
        %s2096 = sand.u32 %s141, 1
        %s2097 = smul.addr %s2096, 32
        %s2098 = scalar_lea.vmem [#allocation11], %s2097
        // Predicated region
        $region57: #{_lstm2_pallas.1} parent=39 // pred_check
          %p2099 = pneg %p151
        $region58: #{_lstm2_pallas.1} parent=39 // pred_check_branch
          %2101 = sbr.rel (%p2099) target = $region60
        $region59: #{_lstm2_pallas.1} parent=39 // pred_region
          %s2102 = smul.u32 4, %s23
          %2104 = vsyncadd %s2095, 0
          %s2105 = smul.addr %s2102, 8
          %s2106 = scalar_lea.hbm %s5, %s2105
          %s2107 = sshll.u32 %s2098, 4
          %s2108 = int_to_ptr.vmem [resolvable:$true] %s2107
          %s2109 = sshll.u32 %s2106, 4
          %s2110 = int_to_ptr.hbm [resolvable:$true] %s2109
          %2115 = dma.vmem_to_hbm [thread:$0]  %s2108, 512, %s2110, %s2095, 128, 128, 8
        $region60: #{_lstm2_pallas.1} parent=39 // pred_fallthru
          _
      $region40: #{_lstm2_pallas.1} parent=5 // pred_fallthru
        _
      %p2116 = scmp.le.s32.totalorder 2, %s18
      // Predicated region
      $region61: #{_lstm2_pallas.1} parent=5 // pred_check
        %p2117 = pneg %p2116
      $region62: #{_lstm2_pallas.1} parent=5 // pred_check_branch
        %2119 = sbr.rel (%p2117) target = $region64
      $region63: #{_lstm2_pallas.1} parent=5 // pred_region
        %s2120 = ssub.s32 %s18, 2
        // Predicated region
        $region65: #{_lstm2_pallas.1} parent=63 // pred_check
          %p2121 = pneg %p157
        $region66: #{_lstm2_pallas.1} parent=63 // pred_check_branch
          %2123 = sbr.rel (%p2121) target = $region68
        $region67: #{_lstm2_pallas.1} parent=63 // pred_region
          %s2124 = sand.u32 %s142, 1
          %s2125 = scalar_lea.sflag [#allocation7], %s2124
          %s2126 = sand.u32 %s142, 1
          %s2127 = smul.addr %s2126, 32
          %s2128 = scalar_lea.vmem [#allocation11], %s2127
          %2130 = dma.done %s2125, 512
        $region68: #{_lstm2_pallas.1} parent=63 // pred_fallthru
          _
      $region64: #{_lstm2_pallas.1} parent=5 // pred_fallthru
        _
    $region6: #{_lstm2_pallas.1} parent=1 // loop_footer
      %s22 = sadd.s32 1, %s18
    $region7: #{_lstm2_pallas.1} parent=1 // loop_footer_branch
      %17 = sbr.rel target = $region3
    $region8: #{_lstm2_pallas.1} parent=1 // loop_exit
      _
    %2131 = vsyncpa [#allocation6], 1
    %s2132 = scalar_lea.sflag [#allocation6], 1
    %2133 = vsyncpa %s2132, 1
    %2134 = vsyncpa [#allocation9], 1
    %2135 = vsyncpa [#allocation7], 1
    %s2136 = scalar_lea.sflag [#allocation7], 1
    %2137 = vsyncpa %s2136, 1

</llo_original>
